<compile_context>
chip_gen: v7x
topology: tpu7x:2x2x1
jax: 0.10.0
libtpu: 0.0.40
codegen_flags: <defaults>
</compile_context>

<pallas_src>
import math

import jax
import jax.numpy as jnp
import numpy as np
from jax import lax
from jax.experimental import pallas as pl
from jax.experimental.pallas import tpu as pltpu

# ----------------------------- module config --------------------------------
LEVELS = (8, 5, 5, 5)
D = len(LEVELS)                       # codebook_dim == self.dim (num_codebooks=1)
K = 1
for _l in LEVELS:
    K *= _l                           # codebook_size = 1000

ENTROPY_LOSS_WEIGHT = 0.1
ENTROPY_LOSS_ANNEALING_STEPS = 0
ENTROPY_LOSS_ANNEALING_FACTOR = 1.0
COMMITMENT_LOSS_WEIGHT = 0.25
DIVERSITY_GAMMA = 1.0
INV_TEMPERATURE = 100.0

EPS_BOUND = 1e-3
EPS_LOG = 1e-5

_basis = [1]
for _l in LEVELS[:-1]:
    _basis.append(_basis[-1] * _l)
BASIS = tuple(_basis)                                            # cumprod([1]+levels[:-1]) = (1,8,40,200)
HALF_WIDTH = tuple(l // 2 for l in LEVELS)
HALF_L = tuple((l - 1) * (1.0 + EPS_BOUND) / 2.0 for l in LEVELS)
OFFSET = tuple(0.5 if (l % 2 == 0) else 0.0 for l in LEVELS)
SHIFT = tuple(math.atanh(o / h) for o, h in zip(OFFSET, HALF_L))

NA = LEVELS[0] * LEVELS[1]            # 40 joint (q0,q1) combinations
NB = LEVELS[2] * LEVELS[3]            # 25 joint (q2,q3) combinations
NC = 6                                # quantize-constant columns


# ------------------------------- kernel --------------------------------------
def _fsq_kernel(z_ref, qc_ref, coef_ref, e0_ref, e1_ref, e2_ref, e3_ref,
                codes_ref, idx_ref, ent_ref, sqe_ref, prob_ref):
    s = pl.program_id(1)
    tm = z_ref.shape[1]

    # per-(core-chunk) accumulator init: the accumulator outputs are revisited
    # output blocks (index map ignores the step axis).
    @pl.when(s == 0)
    def _init():
        ent_ref[...] = jnp.zeros_like(ent_ref)
        sqe_ref[...] = jnp.zeros_like(sqe_ref)
        prob_ref[...] = jnp.zeros_like(prob_ref)

    # per-level quantize constants, (D, 1) columns
    half_l = qc_ref[:, 0:1]
    offset = qc_ref[:, 1:2]
    shift = qc_ref[:, 2:3]
    half_w = qc_ref[:, 3:4]
    basis = qc_ref[:, 4:5]
    inv_half_w = qc_ref[:, 5:6]

    z = z_ref[...]                                               # (D, tm) f32

    # ---- quantize: bound -> round (STE forward value) -> normalize ----
    bounded = jnp.tanh(z + shift) * half_l - offset
    q = jnp.round(bounded)                                       # integer levels, centered
    codes = q * inv_half_w
    codes_ref[...] = codes

    # ---- codes_to_indices: sum_d (q_d + half_w_d) * basis_d  (exact in f32) ----
    idx_ref[...] = jnp.sum((q + half_w) * basis, axis=0,
                           keepdims=True).astype(jnp.int32)      # (1, tm)

    # ---- commitment (squared error) per token ----
    sq_tok = jnp.sum((z - codes) ** 2, axis=0, keepdims=True)    # (1, tm)

    # ---- per-dim softmax over levels (product-codebook factorization) ----
    # level logits for dim d: 2*tau * c_{d,v} * z_d   (pure VPU, exact f32)
    coef = coef_ref[...]                                         # (32, 1)

    def dim_softmax(d, n_levels):
        cd = coef[8 * d:8 * d + n_levels, :]                     # (L, 1), tile-aligned slice
        zd = z[d:d + 1, :]                                       # (1, tm)
        lg = cd * zd                                             # (L, tm)
        m = jnp.max(lg, axis=0, keepdims=True)                   # (1, tm)
        t = lg - m
        e = jnp.exp(t)
        ssum = jnp.sum(e, axis=0, keepdims=True)                 # (1, tm)
        inv = 1.0 / ssum
        # exact entropy of the per-dim softmax: H = log S - sum(e*t)/S
        h = jnp.log(ssum) - jnp.sum(e * t, axis=0, keepdims=True) * inv
        return e * inv, h

    p0, h0 = dim_softmax(0, LEVELS[0])
    p1, h1 = dim_softmax(1, LEVELS[1])
    p2, h2 = dim_softmax(2, LEVELS[2])
    p3, h3 = dim_softmax(3, LEVELS[3])

    # entropy of the joint (product) distribution == sum of marginal entropies
    ent_tok = (h0 + h1) + (h2 + h3)                              # (1, tm)

    # ---- joint probabilities / avg_prob via one MXU contraction ----
    # A[q0 + 8*q1, n] = p0[q0,n]*p1[q1,n] ; B[q2 + 5*q3, n] = p2[q2,n]*p3[q3,n]
    # sum_n B[b,n]*A[a,n]  ==  B @ A^T  -> all 1000 joint probs summed over tokens.
    a_mat = (jnp.dot(e0_ref[...], p0, preferred_element_type=jnp.float32)
             * jnp.dot(e1_ref[...], p1, preferred_element_type=jnp.float32))   # (40, tm)
    b_mat = (jnp.dot(e2_ref[...], p2, preferred_element_type=jnp.float32)
             * jnp.dot(e3_ref[...], p3, preferred_element_type=jnp.float32))   # (25, tm)
    contrib = lax.dot_general(b_mat, a_mat,
                              dimension_numbers=(((1,), (1,)), ((), ())),
                              preferred_element_type=jnp.float32)              # (25, 40)
    prob_ref[...] += contrib

    # ---- token partial sums kept as 128-lane groups (pure VPU vreg adds) ----
    def lane_group_sum(x):
        acc = x[:, 0:128]
        for j in range(1, tm // 128):
            acc = acc + x[:, j * 128:(j + 1) * 128]
        return acc

    ent_ref[...] += lane_group_sum(ent_tok)                      # (1, 128)
    sqe_ref[...] += lane_group_sum(sq_tok)                       # (1, 128)


# ------------------------------ constants ------------------------------------
def _quant_consts():
    """(D, NC): [half_l, offset, shift, half_w, basis, 1/half_w] per level."""
    c = np.zeros((D, NC), np.float32)
    for d in range(D):
        c[d] = (HALF_L[d], OFFSET[d], SHIFT[d], HALF_WIDTH[d], BASIS[d],
                1.0 / HALF_WIDTH[d])
    return jnp.asarray(c)


def _level_coefs():
    """(32, 1): row 8*d+v holds 2*tau*c_{d,v} = 2*tau*(v - half_w_d)/half_w_d."""
    c = np.zeros((8 * D, 1), np.float32)
    for d in range(D):
        hw = HALF_WIDTH[d]
        for v in range(LEVELS[d]):
            c[8 * d + v, 0] = 2.0 * INV_TEMPERATURE * (v - hw) / hw
    return jnp.asarray(c)


def _selection_matrices():
    """0/1 matrices expanding per-dim probs to the joint (A, B) row index spaces."""
    e0 = np.zeros((NA, LEVELS[0]), np.float32)
    e1 = np.zeros((NA, LEVELS[1]), np.float32)
    for a in range(NA):
        e0[a, a % LEVELS[0]] = 1.0
        e1[a, a // LEVELS[0]] = 1.0
    e2 = np.zeros((NB, LEVELS[2]), np.float32)
    e3 = np.zeros((NB, LEVELS[3]), np.float32)
    for b in range(NB):
        e2[b, b % LEVELS[2]] = 1.0
        e3[b, b // LEVELS[2]] = 1.0
    return jnp.asarray(e0), jnp.asarray(e1), jnp.asarray(e2), jnp.asarray(e3)


def _implicit_codebook():
    """indices_to_codes(arange(codebook_size), project_out=False) -> (K, D)."""
    idx = jnp.arange(K, dtype=jnp.int32)[:, None]
    basis = jnp.asarray(BASIS, jnp.int32)[None, :]
    levels = jnp.asarray(LEVELS, jnp.int32)[None, :]
    half_w = jnp.asarray(HALF_WIDTH, jnp.float32)[None, :]
    cnc = (idx // basis) % levels
    return (cnc.astype(jnp.float32) - half_w) / half_w


def _entropy_loss_weight(n_steps):
    if n_steps >= ENTROPY_LOSS_ANNEALING_STEPS:
        return ENTROPY_LOSS_WEIGHT
    start = ENTROPY_LOSS_ANNEALING_FACTOR * ENTROPY_LOSS_WEIGHT
    return start - n_steps / ENTROPY_LOSS_ANNEALING_STEPS * (start - ENTROPY_LOSS_WEIGHT)


# -------------------------------- wrapper -------------------------------------
def fsq_forward(z, n_steps=0, tile_m=2048):
    """z: (B, D, H, W) NCHW.  Returns (out_nchw, {'indices', 'aux_loss'})."""
    B, C, H, W = z.shape
    assert C == D, f"expected channel dim {D}, got {C}"
    BN = B * H * W
    assert BN % 128 == 0, "token count must be a multiple of 128"

    tm = max(128, (min(tile_m, BN) // 128) * 128)
    while BN % tm != 0:
        tm -= 128
    steps = BN // tm
    n_par = 2 if (steps % 2 == 0 and steps >= 2) else 1          # 2-TC split on v7x
    spp = steps // n_par

    # lane-dense token layout: (D, BN)
    zt = jnp.transpose(z, (1, 0, 2, 3)).reshape(D, BN).astype(jnp.float32)

    qc = _quant_consts()
    coef = _level_coefs()
    e0, e1, e2, e3 = _selection_matrices()

    grid_spec = pltpu.PrefetchScalarGridSpec(
        num_scalar_prefetch=0,
        grid=(n_par, spp),
        in_specs=[
            pl.BlockSpec((D, tm), lambda c, s: (0, c * spp + s)),
            pl.BlockSpec((D, NC), lambda c, s: (0, 0)),
            pl.BlockSpec((8 * D, 1), lambda c, s: (0, 0)),
            pl.BlockSpec((NA, LEVELS[0]), lambda c, s: (0, 0)),
            pl.BlockSpec((NA, LEVELS[1]), lambda c, s: (0, 0)),
            pl.BlockSpec((NB, LEVELS[2]), lambda c, s: (0, 0)),
            pl.BlockSpec((NB, LEVELS[3]), lambda c, s: (0, 0)),
        ],
        out_specs=[
            pl.BlockSpec((D, tm), lambda c, s: (0, c * spp + s)),
            pl.BlockSpec((1, tm), lambda c, s: (0, c * spp + s)),
            pl.BlockSpec((None, 1, 128), lambda c, s: (c, 0, 0)),
            pl.BlockSpec((None, 1, 128), lambda c, s: (c, 0, 0)),
            pl.BlockSpec((None, NB, NA), lambda c, s: (c, 0, 0)),
        ],
    )
    codes_t, idx_t, ent_part, sqe_part, prob_part = pl.pallas_call(
        _fsq_kernel,
        grid_spec=grid_spec,
        out_shape=[
            jax.ShapeDtypeStruct((D, BN), jnp.float32),
            jax.ShapeDtypeStruct((1, BN), jnp.int32),
            jax.ShapeDtypeStruct((n_par, 1, 128), jnp.float32),
            jax.ShapeDtypeStruct((n_par, 1, 128), jnp.float32),
            jax.ShapeDtypeStruct((n_par, NB, NA), jnp.float32),
        ],
        compiler_params=pltpu.CompilerParams(
            dimension_semantics=("parallel", "arbitrary"),
            vmem_limit_bytes=32 * 1024 * 1024),
    )(zt, qc, coef, e0, e1, e2, e3)

    out = jnp.transpose(codes_t.reshape(D, B, H, W), (1, 0, 2, 3)).astype(z.dtype)
    indices = idx_t.reshape(B, H, W)

    # tiny finalize math (O(K) values) in the wrapper
    bn = jnp.float32(BN)
    per_sample_entropy = jnp.sum(ent_part) / bn
    avg_prob = jnp.sum(prob_part, axis=0).reshape(-1) / bn       # (K,) joint probabilities
    # TODO(synk): maybe_distributed_mean(avg_prob) is identity (single device).
    codebook_entropy = jnp.sum(-avg_prob * jnp.log(jnp.maximum(avg_prob, EPS_LOG)))
    commit_loss = jnp.sum(sqe_part) / (bn * D)
    entropy_aux_loss = per_sample_entropy - DIVERSITY_GAMMA * codebook_entropy
    aux_loss = (entropy_aux_loss * _entropy_loss_weight(n_steps)
                + commit_loss * COMMITMENT_LOSS_WEIGHT)
    return out, dict(indices=indices, aux_loss=aux_loss)


# ------------------------- plain-JAX reference (check) -----------------------
def fsq_forward_ref(z, n_steps=0):
    B, C, H, W = z.shape
    z2d = jnp.transpose(z, (0, 2, 3, 1)).reshape(-1, D).astype(jnp.float32)
    half_l = jnp.asarray(HALF_L, jnp.float32)
    offset = jnp.asarray(OFFSET, jnp.float32)
    shift = jnp.asarray(SHIFT, jnp.float32)
    half_w = jnp.asarray(HALF_WIDTH, jnp.float32)
    basis = jnp.asarray(BASIS, jnp.float32)

    bounded = jnp.tanh(z2d + shift) * half_l - offset
    codes = jnp.round(bounded) / half_w
    indices = jnp.sum((codes * half_w + half_w) * basis, axis=-1).astype(jnp.int32)

    cb = _implicit_codebook()
    logits = 2.0 * INV_TEMPERATURE * jnp.dot(z2d, cb.T, precision=lax.Precision.HIGHEST)
    prob = jax.nn.softmax(logits, axis=-1)
    pse = jnp.mean(jnp.sum(-prob * jnp.log(jnp.maximum(prob, EPS_LOG)), axis=-1))
    avg_prob = prob.mean(axis=0)
    cbe = jnp.sum(-avg_prob * jnp.log(jnp.maximum(avg_prob, EPS_LOG)))
    commit = jnp.mean((z2d - codes) ** 2)
    aux = ((pse - DIVERSITY_GAMMA * cbe) * _entropy_loss_weight(n_steps)
           + commit * COMMITMENT_LOSS_WEIGHT)

    out = jnp.transpose(codes.reshape(B, H, W, D), (0, 3, 1, 2)).astype(z.dtype)
    return out, dict(indices=indices.reshape(B, H, W), aux_loss=aux)


if __name__ == "__main__":
    key = jax.random.PRNGKey(0)
    z = jax.random.normal(key, (2, D, 16, 16), dtype=jnp.float32)   # NCHW, C == len(levels)

    out, info = fsq_forward(z)
    out = jax.block_until_ready(out)
    jax.block_until_ready(info["aux_loss"])
    jax.block_until_ready(info["indices"])

    ref_out, ref_info = fsq_forward_ref(z)
    assert out.shape == z.shape and out.dtype == z.dtype
    assert info["indices"].shape == (2, 16, 16) and info["indices"].dtype == jnp.int32
    assert bool(jnp.all((info["indices"] >= 0) & (info["indices"] < K)))
    assert float(jnp.mean(jnp.abs(out - ref_out))) < 1e-2
    assert abs(float(info["aux_loss"]) - float(ref_info["aux_loss"])) < 1e-3

    # second call with tiny tiles to exercise the multi-step + 2-chunk (parallel
    # axis) accumulation path on the same data
    out2, info2 = fsq_forward(z, tile_m=128)
    jax.block_until_ready(info2["aux_loss"])
    assert float(jnp.mean(jnp.abs(out2 - ref_out))) < 1e-2
    assert abs(float(info2["aux_loss"]) - float(ref_info["aux_loss"])) < 1e-3

    print("KERNEL_OK")
</pallas_src>

<mosaic_0001>
module attributes {stable_mosaic.version = 11 : i64} {
  func.func @_fsq_kernel(%arg0: i32, %arg1: i32, %arg2: memref<4x512xf32, #tpu.memory_space<vmem>>, %arg3: memref<4x6xf32, #tpu.memory_space<vmem>>, %arg4: memref<32x1xf32, #tpu.memory_space<vmem>>, %arg5: memref<40x8xf32, #tpu.memory_space<vmem>>, %arg6: memref<40x5xf32, #tpu.memory_space<vmem>>, %arg7: memref<25x5xf32, #tpu.memory_space<vmem>>, %arg8: memref<25x5xf32, #tpu.memory_space<vmem>>, %arg9: memref<4x512xf32, #tpu.memory_space<vmem>>, %arg10: memref<1x512xi32, #tpu.memory_space<vmem>>, %arg11: memref<1x1x128xf32, #tpu.memory_space<vmem>>, %arg12: memref<1x1x128xf32, #tpu.memory_space<vmem>>, %arg13: memref<1x25x40xf32, #tpu.memory_space<vmem>>) attributes {dimension_semantics = [#tpu.dimension_semantics<parallel>, #tpu.dimension_semantics<arbitrary>], iteration_bounds = array<i64: 1, 1>, scalar_prefetch = 0 : i64, scratch_operands = 0 : i64, tpu.core_type = #tpu.core_type<tc>, window_params = [{transform_indices = @transform_0, window_bounds = array<i64: 4, 512>}, {pipeline_mode = #tpu.pipeline_mode<synchronous>, transform_indices = @transform_1, window_bounds = array<i64: 4, 6>}, {pipeline_mode = #tpu.pipeline_mode<synchronous>, transform_indices = @transform_2, window_bounds = array<i64: 32, 1>}, {pipeline_mode = #tpu.pipeline_mode<synchronous>, transform_indices = @transform_3, window_bounds = array<i64: 40, 8>}, {pipeline_mode = #tpu.pipeline_mode<synchronous>, transform_indices = @transform_4, window_bounds = array<i64: 40, 5>}, {pipeline_mode = #tpu.pipeline_mode<synchronous>, transform_indices = @transform_5, window_bounds = array<i64: 25, 5>}, {pipeline_mode = #tpu.pipeline_mode<synchronous>, transform_indices = @transform_6, window_bounds = array<i64: 25, 5>}, {transform_indices = @transform_7, window_bounds = array<i64: 4, 512>}, {transform_indices = @transform_8, window_bounds = array<i64: 1, 512>}, {transform_indices = @transform_9, window_bounds = array<i64: 1, 1, 128>}, {transform_indices = @transform_10, window_bounds = array<i64: 1, 1, 128>}, {transform_indices = @transform_11, window_bounds = array<i64: 1, 25, 40>}]} {
    %c0_i32 = arith.constant 0 : i32
    %0 = arith.cmpi eq, %arg1, %c0_i32 : i32
    %1 = arith.extui %0 : i1 to i32
    %c0_i32_0 = arith.constant 0 : i32
    %2 = arith.cmpi ne, %1, %c0_i32_0 : i32
    scf.if %2 {
      %cst_63 = arith.constant 0.000000e+00 : f32
      %168 = vector.broadcast %cst_63 : f32 to vector<1x128xf32>
      %c0_64 = arith.constant 0 : index
      %c0_65 = arith.constant 0 : index
      %c0_66 = arith.constant 0 : index
      %169 = vector.load %arg11[%c0_64, %c0_65, %c0_66] : memref<1x1x128xf32, #tpu.memory_space<vmem>>, vector<1x1x128xf32>
      %170 = vector.shape_cast %169 : vector<1x1x128xf32> to vector<1x128xf32>
      %171 = vector.shape_cast %168 : vector<1x128xf32> to vector<1x1x128xf32>
      tpu.vector_store %arg11[%c0_64, %c0_65, %c0_66], %171 {strides = array<i32>} : memref<1x1x128xf32, #tpu.memory_space<vmem>>, vector<1x1x128xf32>,
      %cst_67 = arith.constant 0.000000e+00 : f32
      %172 = vector.broadcast %cst_67 : f32 to vector<1x128xf32>
      %c0_68 = arith.constant 0 : index
      %c0_69 = arith.constant 0 : index
      %c0_70 = arith.constant 0 : index
      %173 = vector.load %arg12[%c0_68, %c0_69, %c0_70] : memref<1x1x128xf32, #tpu.memory_space<vmem>>, vector<1x1x128xf32>
      %174 = vector.shape_cast %173 : vector<1x1x128xf32> to vector<1x128xf32>
      %175 = vector.shape_cast %172 : vector<1x128xf32> to vector<1x1x128xf32>
      tpu.vector_store %arg12[%c0_68, %c0_69, %c0_70], %175 {strides = array<i32>} : memref<1x1x128xf32, #tpu.memory_space<vmem>>, vector<1x1x128xf32>,
      %cst_71 = arith.constant 0.000000e+00 : f32
      %176 = vector.broadcast %cst_71 : f32 to vector<25x40xf32>
      %c0_72 = arith.constant 0 : index
      %c0_73 = arith.constant 0 : index
      %c0_74 = arith.constant 0 : index
      %177 = vector.load %arg13[%c0_72, %c0_73, %c0_74] : memref<1x25x40xf32, #tpu.memory_space<vmem>>, vector<1x25x40xf32>
      %178 = vector.shape_cast %177 : vector<1x25x40xf32> to vector<25x40xf32>
      %179 = vector.shape_cast %176 : vector<25x40xf32> to vector<1x25x40xf32>
      tpu.vector_store %arg13[%c0_72, %c0_73, %c0_74], %179 {strides = array<i32>} : memref<1x25x40xf32, #tpu.memory_space<vmem>>, vector<1x25x40xf32>,
    } else {
    }
    %c0 = arith.constant 0 : index
    %c0_1 = arith.constant 0 : index
    %3 = vector.load %arg3[%c0, %c0_1] : memref<4x6xf32, #tpu.memory_space<vmem>>, vector<4x1xf32>
    %c0_2 = arith.constant 0 : index
    %c1 = arith.constant 1 : index
    %4 = vector.load %arg3[%c0_2, %c1] : memref<4x6xf32, #tpu.memory_space<vmem>>, vector<4x1xf32>
    %c0_3 = arith.constant 0 : index
    %c2 = arith.constant 2 : index
    %5 = vector.load %arg3[%c0_3, %c2] : memref<4x6xf32, #tpu.memory_space<vmem>>, vector<4x1xf32>
    %c0_4 = arith.constant 0 : index
    %c3 = arith.constant 3 : index
    %6 = vector.load %arg3[%c0_4, %c3] : memref<4x6xf32, #tpu.memory_space<vmem>>, vector<4x1xf32>
    %c0_5 = arith.constant 0 : index
    %c4 = arith.constant 4 : index
    %7 = vector.load %arg3[%c0_5, %c4] : memref<4x6xf32, #tpu.memory_space<vmem>>, vector<4x1xf32>
    %c0_6 = arith.constant 0 : index
    %c5 = arith.constant 5 : index
    %8 = vector.load %arg3[%c0_6, %c5] : memref<4x6xf32, #tpu.memory_space<vmem>>, vector<4x1xf32>
    %c0_7 = arith.constant 0 : index
    %c0_8 = arith.constant 0 : index
    %9 = vector.load %arg2[%c0_7, %c0_8] : memref<4x512xf32, #tpu.memory_space<vmem>>, vector<4x512xf32>
    %10 = vector.broadcast %5 : vector<4x1xf32> to vector<4x512xf32>
    %11 = arith.addf %9, %10 : vector<4x512xf32>
    %12 = math.tanh %11 : vector<4x512xf32>
    %13 = vector.broadcast %3 : vector<4x1xf32> to vector<4x512xf32>
    %14 = arith.mulf %12, %13 : vector<4x512xf32>
    %15 = vector.broadcast %4 : vector<4x1xf32> to vector<4x512xf32>
    %16 = arith.subf %14, %15 : vector<4x512xf32>
    %17 = math.roundeven %16 : vector<4x512xf32>
    %18 = vector.broadcast %8 : vector<4x1xf32> to vector<4x512xf32>
    %19 = arith.mulf %17, %18 : vector<4x512xf32>
    %c0_9 = arith.constant 0 : index
    %c0_10 = arith.constant 0 : index
    %20 = vector.load %arg9[%c0_9, %c0_10] : memref<4x512xf32, #tpu.memory_space<vmem>>, vector<4x512xf32>
    tpu.vector_store %arg9[%c0_9, %c0_10], %19 {strides = array<i32>} : memref<4x512xf32, #tpu.memory_space<vmem>>, vector<4x512xf32>,
    %21 = vector.broadcast %6 : vector<4x1xf32> to vector<4x512xf32>
    %22 = arith.addf %17, %21 : vector<4x512xf32>
    %23 = vector.broadcast %7 : vector<4x1xf32> to vector<4x512xf32>
    %24 = arith.mulf %22, %23 : vector<4x512xf32>
    %cst = arith.constant dense<0.000000e+00> : vector<512xf32>
    %25 = vector.multi_reduction <add>, %24, %cst [0] : vector<4x512xf32> to vector<512xf32>
    %26 = vector.shape_cast %25 : vector<512xf32> to vector<1x512xf32>
    %27 = arith.fptosi %26 : vector<1x512xf32> to vector<1x512xi32>
    %c0_11 = arith.constant 0 : index
    %c0_12 = arith.constant 0 : index
    %28 = vector.load %arg10[%c0_11, %c0_12] : memref<1x512xi32, #tpu.memory_space<vmem>>, vector<1x512xi32>
    tpu.vector_store %arg10[%c0_11, %c0_12], %27 {strides = array<i32>} : memref<1x512xi32, #tpu.memory_space<vmem>>, vector<1x512xi32>,
    %29 = arith.subf %9, %19 : vector<4x512xf32>
    %30 = arith.mulf %29, %29 : vector<4x512xf32>
    %cst_13 = arith.constant dense<0.000000e+00> : vector<512xf32>
    %31 = vector.multi_reduction <add>, %30, %cst_13 [0] : vector<4x512xf32> to vector<512xf32>
    %32 = vector.shape_cast %31 : vector<512xf32> to vector<1x512xf32>
    %c0_14 = arith.constant 0 : index
    %c0_15 = arith.constant 0 : index
    %33 = vector.load %arg4[%c0_14, %c0_15] : memref<32x1xf32, #tpu.memory_space<vmem>>, vector<32x1xf32>
    %34 = vector.extract_strided_slice %33 {offsets = [0, 0], sizes = [8, 1], strides = [1, 1]} : vector<32x1xf32> to vector<8x1xf32>
    %35 = vector.extract_strided_slice %9 {offsets = [0, 0], sizes = [1, 512], strides = [1, 1]} : vector<4x512xf32> to vector<1x512xf32>
    %36 = vector.broadcast %34 : vector<8x1xf32> to vector<8x512xf32>
    %37 = vector.broadcast %35 : vector<1x512xf32> to vector<8x512xf32>
    %38 = arith.mulf %36, %37 : vector<8x512xf32>
    %cst_16 = arith.constant dense<0xFF800000> : vector<512xf32>
    %39 = vector.multi_reduction <maximumf>, %38, %cst_16 [0] : vector<8x512xf32> to vector<512xf32>
    %40 = vector.shape_cast %39 : vector<512xf32> to vector<1x512xf32>
    %41 = vector.broadcast %40 : vector<1x512xf32> to vector<8x512xf32>
    %42 = arith.subf %38, %41 : vector<8x512xf32>
    %43 = math.exp %42 : vector<8x512xf32>
    %cst_17 = arith.constant dense<0.000000e+00> : vector<512xf32>
    %44 = vector.multi_reduction <add>, %43, %cst_17 [0] : vector<8x512xf32> to vector<512xf32>
    %45 = vector.shape_cast %44 : vector<512xf32> to vector<1x512xf32>
    %cst_18 = arith.constant 1.000000e+00 : f32
    %46 = vector.broadcast %cst_18 : f32 to vector<1x512xf32>
    %47 = arith.divf %46, %45 : vector<1x512xf32>
    %48 = math.log %45 : vector<1x512xf32>
    %49 = arith.mulf %43, %42 : vector<8x512xf32>
    %cst_19 = arith.constant dense<0.000000e+00> : vector<512xf32>
    %50 = vector.multi_reduction <add>, %49, %cst_19 [0] : vector<8x512xf32> to vector<512xf32>
    %51 = vector.shape_cast %50 : vector<512xf32> to vector<1x512xf32>
    %52 = arith.mulf %51, %47 : vector<1x512xf32>
    %53 = arith.subf %48, %52 : vector<1x512xf32>
    %54 = vector.broadcast %47 : vector<1x512xf32> to vector<8x512xf32>
    %55 = arith.mulf %43, %54 : vector<8x512xf32>
    %56 = vector.extract_strided_slice %33 {offsets = [8, 0], sizes = [5, 1], strides = [1, 1]} : vector<32x1xf32> to vector<5x1xf32>
    %57 = vector.extract_strided_slice %9 {offsets = [1, 0], sizes = [1, 512], strides = [1, 1]} : vector<4x512xf32> to vector<1x512xf32>
    %58 = vector.broadcast %56 : vector<5x1xf32> to vector<5x512xf32>
    %59 = vector.broadcast %57 : vector<1x512xf32> to vector<5x512xf32>
    %60 = arith.mulf %58, %59 : vector<5x512xf32>
    %cst_20 = arith.constant dense<0xFF800000> : vector<512xf32>
    %61 = vector.multi_reduction <maximumf>, %60, %cst_20 [0] : vector<5x512xf32> to vector<512xf32>
    %62 = vector.shape_cast %61 : vector<512xf32> to vector<1x512xf32>
    %63 = vector.broadcast %62 : vector<1x512xf32> to vector<5x512xf32>
    %64 = arith.subf %60, %63 : vector<5x512xf32>
    %65 = math.exp %64 : vector<5x512xf32>
    %cst_21 = arith.constant dense<0.000000e+00> : vector<512xf32>
    %66 = vector.multi_reduction <add>, %65, %cst_21 [0] : vector<5x512xf32> to vector<512xf32>
    %67 = vector.shape_cast %66 : vector<512xf32> to vector<1x512xf32>
    %cst_22 = arith.constant 1.000000e+00 : f32
    %68 = vector.broadcast %cst_22 : f32 to vector<1x512xf32>
    %69 = arith.divf %68, %67 : vector<1x512xf32>
    %70 = math.log %67 : vector<1x512xf32>
    %71 = arith.mulf %65, %64 : vector<5x512xf32>
    %cst_23 = arith.constant dense<0.000000e+00> : vector<512xf32>
    %72 = vector.multi_reduction <add>, %71, %cst_23 [0] : vector<5x512xf32> to vector<512xf32>
    %73 = vector.shape_cast %72 : vector<512xf32> to vector<1x512xf32>
    %74 = arith.mulf %73, %69 : vector<1x512xf32>
    %75 = arith.subf %70, %74 : vector<1x512xf32>
    %76 = vector.broadcast %69 : vector<1x512xf32> to vector<5x512xf32>
    %77 = arith.mulf %65, %76 : vector<5x512xf32>
    %78 = vector.extract_strided_slice %33 {offsets = [16, 0], sizes = [5, 1], strides = [1, 1]} : vector<32x1xf32> to vector<5x1xf32>
    %79 = vector.extract_strided_slice %9 {offsets = [2, 0], sizes = [1, 512], strides = [1, 1]} : vector<4x512xf32> to vector<1x512xf32>
    %80 = vector.broadcast %78 : vector<5x1xf32> to vector<5x512xf32>
    %81 = vector.broadcast %79 : vector<1x512xf32> to vector<5x512xf32>
    %82 = arith.mulf %80, %81 : vector<5x512xf32>
    %cst_24 = arith.constant dense<0xFF800000> : vector<512xf32>
    %83 = vector.multi_reduction <maximumf>, %82, %cst_24 [0] : vector<5x512xf32> to vector<512xf32>
    %84 = vector.shape_cast %83 : vector<512xf32> to vector<1x512xf32>
    %85 = vector.broadcast %84 : vector<1x512xf32> to vector<5x512xf32>
    %86 = arith.subf %82, %85 : vector<5x512xf32>
    %87 = math.exp %86 : vector<5x512xf32>
    %cst_25 = arith.constant dense<0.000000e+00> : vector<512xf32>
    %88 = vector.multi_reduction <add>, %87, %cst_25 [0] : vector<5x512xf32> to vector<512xf32>
    %89 = vector.shape_cast %88 : vector<512xf32> to vector<1x512xf32>
    %cst_26 = arith.constant 1.000000e+00 : f32
    %90 = vector.broadcast %cst_26 : f32 to vector<1x512xf32>
    %91 = arith.divf %90, %89 : vector<1x512xf32>
    %92 = math.log %89 : vector<1x512xf32>
    %93 = arith.mulf %87, %86 : vector<5x512xf32>
    %cst_27 = arith.constant dense<0.000000e+00> : vector<512xf32>
    %94 = vector.multi_reduction <add>, %93, %cst_27 [0] : vector<5x512xf32> to vector<512xf32>
    %95 = vector.shape_cast %94 : vector<512xf32> to vector<1x512xf32>
    %96 = arith.mulf %95, %91 : vector<1x512xf32>
    %97 = arith.subf %92, %96 : vector<1x512xf32>
    %98 = vector.broadcast %91 : vector<1x512xf32> to vector<5x512xf32>
    %99 = arith.mulf %87, %98 : vector<5x512xf32>
    %100 = vector.extract_strided_slice %33 {offsets = [24, 0], sizes = [5, 1], strides = [1, 1]} : vector<32x1xf32> to vector<5x1xf32>
    %101 = vector.extract_strided_slice %9 {offsets = [3, 0], sizes = [1, 512], strides = [1, 1]} : vector<4x512xf32> to vector<1x512xf32>
    %102 = vector.broadcast %100 : vector<5x1xf32> to vector<5x512xf32>
    %103 = vector.broadcast %101 : vector<1x512xf32> to vector<5x512xf32>
    %104 = arith.mulf %102, %103 : vector<5x512xf32>
    %cst_28 = arith.constant dense<0xFF800000> : vector<512xf32>
    %105 = vector.multi_reduction <maximumf>, %104, %cst_28 [0] : vector<5x512xf32> to vector<512xf32>
    %106 = vector.shape_cast %105 : vector<512xf32> to vector<1x512xf32>
    %107 = vector.broadcast %106 : vector<1x512xf32> to vector<5x512xf32>
    %108 = arith.subf %104, %107 : vector<5x512xf32>
    %109 = math.exp %108 : vector<5x512xf32>
    %cst_29 = arith.constant dense<0.000000e+00> : vector<512xf32>
    %110 = vector.multi_reduction <add>, %109, %cst_29 [0] : vector<5x512xf32> to vector<512xf32>
    %111 = vector.shape_cast %110 : vector<512xf32> to vector<1x512xf32>
    %cst_30 = arith.constant 1.000000e+00 : f32
    %112 = vector.broadcast %cst_30 : f32 to vector<1x512xf32>
    %113 = arith.divf %112, %111 : vector<1x512xf32>
    %114 = math.log %111 : vector<1x512xf32>
    %115 = arith.mulf %109, %108 : vector<5x512xf32>
    %cst_31 = arith.constant dense<0.000000e+00> : vector<512xf32>
    %116 = vector.multi_reduction <add>, %115, %cst_31 [0] : vector<5x512xf32> to vector<512xf32>
    %117 = vector.shape_cast %116 : vector<512xf32> to vector<1x512xf32>
    %118 = arith.mulf %117, %113 : vector<1x512xf32>
    %119 = arith.subf %114, %118 : vector<1x512xf32>
    %120 = vector.broadcast %113 : vector<1x512xf32> to vector<5x512xf32>
    %121 = arith.mulf %109, %120 : vector<5x512xf32>
    %122 = arith.addf %53, %75 : vector<1x512xf32>
    %123 = arith.addf %97, %119 : vector<1x512xf32>
    %124 = arith.addf %122, %123 : vector<1x512xf32>
    %c0_32 = arith.constant 0 : index
    %c0_33 = arith.constant 0 : index
    %125 = vector.load %arg5[%c0_32, %c0_33] : memref<40x8xf32, #tpu.memory_space<vmem>>, vector<40x8xf32>
    %cst_34 = arith.constant dense<0.000000e+00> : vector<40x512xf32>
    %126 = tpu.matmul %125, %55, %cst_34 {dimension_numbers = #tpu.dot_dimension_numbers<[1], [0], [0], [1], [0, 0, 1, 1], [], []>} : vector<40x8xf32>, vector<8x512xf32>, vector<40x512xf32> -> vector<40x512xf32>
    %c0_35 = arith.constant 0 : index
    %c0_36 = arith.constant 0 : index
    %127 = vector.load %arg6[%c0_35, %c0_36] : memref<40x5xf32, #tpu.memory_space<vmem>>, vector<40x5xf32>
    %cst_37 = arith.constant dense<0.000000e+00> : vector<40x512xf32>
    %128 = tpu.matmul %127, %77, %cst_37 {dimension_numbers = #tpu.dot_dimension_numbers<[1], [0], [0], [1], [0, 0, 1, 1], [], []>} : vector<40x5xf32>, vector<5x512xf32>, vector<40x512xf32> -> vector<40x512xf32>
    %129 = arith.mulf %126, %128 : vector<40x512xf32>
    %c0_38 = arith.constant 0 : index
    %c0_39 = arith.constant 0 : index
    %130 = vector.load %arg7[%c0_38, %c0_39] : memref<25x5xf32, #tpu.memory_space<vmem>>, vector<25x5xf32>
    %cst_40 = arith.constant dense<0.000000e+00> : vector<25x512xf32>
    %131 = tpu.matmul %130, %99, %cst_40 {dimension_numbers = #tpu.dot_dimension_numbers<[1], [0], [0], [1], [0, 0, 1, 1], [], []>} : vector<25x5xf32>, vector<5x512xf32>, vector<25x512xf32> -> vector<25x512xf32>
    %c0_41 = arith.constant 0 : index
    %c0_42 = arith.constant 0 : index
    %132 = vector.load %arg8[%c0_41, %c0_42] : memref<25x5xf32, #tpu.memory_space<vmem>>, vector<25x5xf32>
    %cst_43 = arith.constant dense<0.000000e+00> : vector<25x512xf32>
    %133 = tpu.matmul %132, %121, %cst_43 {dimension_numbers = #tpu.dot_dimension_numbers<[1], [0], [0], [1], [0, 0, 1, 1], [], []>} : vector<25x5xf32>, vector<5x512xf32>, vector<25x512xf32> -> vector<25x512xf32>
    %134 = arith.mulf %131, %133 : vector<25x512xf32>
    %cst_44 = arith.constant dense<0.000000e+00> : vector<25x40xf32>
    %135 = tpu.matmul %134, %129, %cst_44 {dimension_numbers = #tpu.dot_dimension_numbers<[1], [1], [0], [0], [0, 0, 1, 0], [], []>} : vector<25x512xf32>, vector<40x512xf32>, vector<25x40xf32> -> vector<25x40xf32>
    %c0_45 = arith.constant 0 : index
    %c0_46 = arith.constant 0 : index
    %c0_47 = arith.constant 0 : index
    %136 = vector.load %arg13[%c0_45, %c0_46, %c0_47] : memref<1x25x40xf32, #tpu.memory_space<vmem>>, vector<1x25x40xf32>
    %137 = vector.shape_cast %136 : vector<1x25x40xf32> to vector<25x40xf32>
    %138 = arith.addf %137, %135 : vector<25x40xf32>
    %c0_48 = arith.constant 0 : index
    %c0_49 = arith.constant 0 : index
    %c0_50 = arith.constant 0 : index
    %139 = vector.load %arg13[%c0_48, %c0_49, %c0_50] : memref<1x25x40xf32, #tpu.memory_space<vmem>>, vector<1x25x40xf32>
    %140 = vector.shape_cast %139 : vector<1x25x40xf32> to vector<25x40xf32>
    %141 = vector.shape_cast %138 : vector<25x40xf32> to vector<1x25x40xf32>
    tpu.vector_store %arg13[%c0_48, %c0_49, %c0_50], %141 {strides = array<i32>} : memref<1x25x40xf32, #tpu.memory_space<vmem>>, vector<1x25x40xf32>,
    %c0_51 = arith.constant 0 : index
    %c0_52 = arith.constant 0 : index
    %c0_53 = arith.constant 0 : index
    %142 = vector.load %arg11[%c0_51, %c0_52, %c0_53] : memref<1x1x128xf32, #tpu.memory_space<vmem>>, vector<1x1x128xf32>
    %143 = vector.shape_cast %142 : vector<1x1x128xf32> to vector<1x128xf32>
    %144 = vector.extract_strided_slice %124 {offsets = [0, 0], sizes = [1, 128], strides = [1, 1]} : vector<1x512xf32> to vector<1x128xf32>
    %145 = vector.extract_strided_slice %124 {offsets = [0, 128], sizes = [1, 128], strides = [1, 1]} : vector<1x512xf32> to vector<1x128xf32>
    %146 = arith.addf %144, %145 : vector<1x128xf32>
    %147 = vector.extract_strided_slice %124 {offsets = [0, 256], sizes = [1, 128], strides = [1, 1]} : vector<1x512xf32> to vector<1x128xf32>
    %148 = arith.addf %146, %147 : vector<1x128xf32>
    %149 = vector.extract_strided_slice %124 {offsets = [0, 384], sizes = [1, 128], strides = [1, 1]} : vector<1x512xf32> to vector<1x128xf32>
    %150 = arith.addf %148, %149 : vector<1x128xf32>
    %151 = arith.addf %143, %150 : vector<1x128xf32>
    %c0_54 = arith.constant 0 : index
    %c0_55 = arith.constant 0 : index
    %c0_56 = arith.constant 0 : index
    %152 = vector.load %arg11[%c0_54, %c0_55, %c0_56] : memref<1x1x128xf32, #tpu.memory_space<vmem>>, vector<1x1x128xf32>
    %153 = vector.shape_cast %152 : vector<1x1x128xf32> to vector<1x128xf32>
    %154 = vector.shape_cast %151 : vector<1x128xf32> to vector<1x1x128xf32>
    tpu.vector_store %arg11[%c0_54, %c0_55, %c0_56], %154 {strides = array<i32>} : memref<1x1x128xf32, #tpu.memory_space<vmem>>, vector<1x1x128xf32>,
    %c0_57 = arith.constant 0 : index
    %c0_58 = arith.constant 0 : index
    %c0_59 = arith.constant 0 : index
    %155 = vector.load %arg12[%c0_57, %c0_58, %c0_59] : memref<1x1x128xf32, #tpu.memory_space<vmem>>, vector<1x1x128xf32>
    %156 = vector.shape_cast %155 : vector<1x1x128xf32> to vector<1x128xf32>
    %157 = vector.extract_strided_slice %32 {offsets = [0, 0], sizes = [1, 128], strides = [1, 1]} : vector<1x512xf32> to vector<1x128xf32>
    %158 = vector.extract_strided_slice %32 {offsets = [0, 128], sizes = [1, 128], strides = [1, 1]} : vector<1x512xf32> to vector<1x128xf32>
    %159 = arith.addf %157, %158 : vector<1x128xf32>
    %160 = vector.extract_strided_slice %32 {offsets = [0, 256], sizes = [1, 128], strides = [1, 1]} : vector<1x512xf32> to vector<1x128xf32>
    %161 = arith.addf %159, %160 : vector<1x128xf32>
    %162 = vector.extract_strided_slice %32 {offsets = [0, 384], sizes = [1, 128], strides = [1, 1]} : vector<1x512xf32> to vector<1x128xf32>
    %163 = arith.addf %161, %162 : vector<1x128xf32>
    %164 = arith.addf %156, %163 : vector<1x128xf32>
    %c0_60 = arith.constant 0 : index
    %c0_61 = arith.constant 0 : index
    %c0_62 = arith.constant 0 : index
    %165 = vector.load %arg12[%c0_60, %c0_61, %c0_62] : memref<1x1x128xf32, #tpu.memory_space<vmem>>, vector<1x1x128xf32>
    %166 = vector.shape_cast %165 : vector<1x1x128xf32> to vector<1x128xf32>
    %167 = vector.shape_cast %164 : vector<1x128xf32> to vector<1x1x128xf32>
    tpu.vector_store %arg12[%c0_60, %c0_61, %c0_62], %167 {strides = array<i32>} : memref<1x1x128xf32, #tpu.memory_space<vmem>>, vector<1x1x128xf32>,
    return
  }
  func.func @transform_0(%arg0: i32, %arg1: i32) -> (i32, i32) {
    %c1_i32 = arith.constant 1 : i32
    %0 = arith.muli %arg0, %c1_i32 : i32
    %1 = arith.addi %0, %arg1 : i32
    %c0_i32 = arith.constant 0 : i32
    %c0_i32_0 = arith.constant 0 : i32
    return %c0_i32, %1 : i32, i32
  }
  func.func @transform_1(%arg0: i32, %arg1: i32) -> (i32, i32) {
    %c0_i32 = arith.constant 0 : i32
    %c0_i32_0 = arith.constant 0 : i32
    %c0_i32_1 = arith.constant 0 : i32
    return %c0_i32, %c0_i32_0 : i32, i32
  }
  func.func @transform_2(%arg0: i32, %arg1: i32) -> (i32, i32) {
    %c0_i32 = arith.constant 0 : i32
    %c0_i32_0 = arith.constant 0 : i32
    %c0_i32_1 = arith.constant 0 : i32
    return %c0_i32, %c0_i32_0 : i32, i32
  }
  func.func @transform_3(%arg0: i32, %arg1: i32) -> (i32, i32) {
    %c0_i32 = arith.constant 0 : i32
    %c0_i32_0 = arith.constant 0 : i32
    %c0_i32_1 = arith.constant 0 : i32
    return %c0_i32, %c0_i32_0 : i32, i32
  }
  func.func @transform_4(%arg0: i32, %arg1: i32) -> (i32, i32) {
    %c0_i32 = arith.constant 0 : i32
    %c0_i32_0 = arith.constant 0 : i32
    %c0_i32_1 = arith.constant 0 : i32
    return %c0_i32, %c0_i32_0 : i32, i32
  }
  func.func @transform_5(%arg0: i32, %arg1: i32) -> (i32, i32) {
    %c0_i32 = arith.constant 0 : i32
    %c0_i32_0 = arith.constant 0 : i32
    %c0_i32_1 = arith.constant 0 : i32
    return %c0_i32, %c0_i32_0 : i32, i32
  }
  func.func @transform_6(%arg0: i32, %arg1: i32) -> (i32, i32) {
    %c0_i32 = arith.constant 0 : i32
    %c0_i32_0 = arith.constant 0 : i32
    %c0_i32_1 = arith.constant 0 : i32
    return %c0_i32, %c0_i32_0 : i32, i32
  }
  func.func @transform_7(%arg0: i32, %arg1: i32) -> (i32, i32) {
    %c1_i32 = arith.constant 1 : i32
    %0 = arith.muli %arg0, %c1_i32 : i32
    %1 = arith.addi %0, %arg1 : i32
    %c0_i32 = arith.constant 0 : i32
    %c0_i32_0 = arith.constant 0 : i32
    return %c0_i32, %1 : i32, i32
  }
  func.func @transform_8(%arg0: i32, %arg1: i32) -> (i32, i32) {
    %c1_i32 = arith.constant 1 : i32
    %0 = arith.muli %arg0, %c1_i32 : i32
    %1 = arith.addi %0, %arg1 : i32
    %c0_i32 = arith.constant 0 : i32
    %c0_i32_0 = arith.constant 0 : i32
    return %c0_i32, %1 : i32, i32
  }
  func.func @transform_9(%arg0: i32, %arg1: i32) -> (i32, i32, i32) {
    %c0_i32 = arith.constant 0 : i32
    %c0_i32_0 = arith.constant 0 : i32
    %c0_i32_1 = arith.constant 0 : i32
    return %arg0, %c0_i32, %c0_i32_0 : i32, i32, i32
  }
  func.func @transform_10(%arg0: i32, %arg1: i32) -> (i32, i32, i32) {
    %c0_i32 = arith.constant 0 : i32
    %c0_i32_0 = arith.constant 0 : i32
    %c0_i32_1 = arith.constant 0 : i32
    return %arg0, %c0_i32, %c0_i32_0 : i32, i32, i32
  }
  func.func @transform_11(%arg0: i32, %arg1: i32) -> (i32, i32, i32) {
    %c0_i32 = arith.constant 0 : i32
    %c0_i32_0 = arith.constant 0 : i32
    %c0_i32_1 = arith.constant 0 : i32
    return %arg0, %c0_i32, %c0_i32_0 : i32, i32, i32
  }
}

</mosaic_0001>

<llo_original>
// kernel: tpu_custom_call.1
$region0: #{tpu_custom_call.1}
  #allocation0 [shape = 'u32[]', space=smem, size = 0x4, offset = 0x4, fixed_abs, tag = 'smem constant byte address 0x4 - core index']
  #allocation1 [shape = 'u32[144,128]{1,0:T(1,128)}', space=vmem, size = 0x12000, scoped, tag = 'internal scratch']
  %s0 = inlined_call_operand.vmem [shape: f32[4,512], index: 0, kind: input, shape index: {}]
  %s1 = inlined_call_operand.vmem [shape: f32[4,6], index: 1, kind: input, shape index: {}]
  %s2 = inlined_call_operand.vmem [shape: f32[32,1], index: 2, kind: input, shape index: {}]
  %s3 = inlined_call_operand.vmem [shape: f32[40,8], index: 3, kind: input, shape index: {}]
  %s4 = inlined_call_operand.vmem [shape: f32[40,5], index: 4, kind: input, shape index: {}]
  %s5 = inlined_call_operand.vmem [shape: f32[25,5], index: 5, kind: input, shape index: {}]
  %s6 = inlined_call_operand.vmem [shape: f32[25,5], index: 6, kind: input, shape index: {}]
  %s7 = inlined_call_operand.hbm [shape: f32[4,512], index: 7, kind: output, shape index: {0}]
  %s8 = inlined_call_operand.hbm [shape: s32[1,512], index: 8, kind: output, shape index: {1}]
  %s9 = inlined_call_operand.hbm [shape: f32[1,1,128], index: 9, kind: output, shape index: {2}]
  %s10 = inlined_call_operand.hbm [shape: f32[1,1,128], index: 10, kind: output, shape index: {3}]
  %s11 = inlined_call_operand.vmem [shape: f32[1,25,40], index: 11, kind: output, shape index: {4}]
  %12 = xla_tuple %s7, %s8, %s9, %s10, %s11
  %s13 = sld [smem:[#allocation0]]
  $region74: #{tpu_custom_call.1} parent=0
    _
  %s15 = ssub.s32 1, %s13
  %s16 = scalar_select 0, %s15, %s13
  $region1: #{tpu_custom_call.1} parent=0
    #allocation2 [shape = 'u8[8192]{0}', space=vmem, size = 0x2000, scoped, tag = 'output window, operand 0, single buffered']
    #allocation3 [shape = 's32[1]{0}', space=sflag, size = 0x4, scoped, tag = 'scoped memory for tpu_custom_call.1']
    #allocation4 [shape = 'u8[2048]{0}', space=vmem, size = 0x800, scoped, tag = 'output window, operand 1, single buffered']
    #allocation5 [shape = 's32[1]{0}', space=sflag, size = 0x4, scoped, tag = 'scoped memory for tpu_custom_call.1']
    #allocation6 [shape = 'u8[512]{0}', space=vmem, size = 0x400, scoped, tag = 'output window, operand 2, single buffered']
    #allocation7 [shape = 'u8[512]{0}', space=vmem, size = 0x400, scoped, tag = 'output window, operand 3, single buffered']
    #allocation8 [shape = 's32[1]{0}', space=sflag, size = 0x4, scoped, tag = 'scoped memory for tpu_custom_call.1']
    %17 = vsyncpa [#allocation3], 0
    %18 = vsyncpa [#allocation5], 0
    %19 = vsyncpa [#allocation8], 0
    // Predicated region
    $region2: #{tpu_custom_call.1} parent=1 // pred_check
      _
    $region3: #{tpu_custom_call.1} parent=1 // pred_check_branch
      %21 = sbr.rel (0) target = $region5
    $region4: #{tpu_custom_call.1} parent=1 // pred_region
      %s22 = sadd.s32 0, 0
      %s23 = smul.u32 4, %s22
      %p24 = scmp.lt.s32.totalorder %s23, 3
      %s25 = scalar_select %p24, %s23, 3
      %s26 = smul.addr %s25, 4
      %s27 = scalar_lea.vmem %s0, %s26
      %s28 = sadd.s32 0, 0
      %s29 = smul.u32 4, %s28
    $region5: #{tpu_custom_call.1} parent=1 // pred_fallthru
      _
    // Predicated region
    $region6: #{tpu_custom_call.1} parent=1 // pred_check
      _
    $region7: #{tpu_custom_call.1} parent=1 // pred_check_branch
      %31 = sbr.rel (0) target = $region9
    $region8: #{tpu_custom_call.1} parent=1 // pred_region
      _
    $region9: #{tpu_custom_call.1} parent=1 // pred_fallthru
      _
    // Predicated region
    $region10: #{tpu_custom_call.1} parent=1 // pred_check
      _
    $region11: #{tpu_custom_call.1} parent=1 // pred_check_branch
      %33 = sbr.rel (0) target = $region13
    $region12: #{tpu_custom_call.1} parent=1 // pred_region
      _
    $region13: #{tpu_custom_call.1} parent=1 // pred_fallthru
      _
    // Predicated region
    $region14: #{tpu_custom_call.1} parent=1 // pred_check
      _
    $region15: #{tpu_custom_call.1} parent=1 // pred_check_branch
      %35 = sbr.rel (0) target = $region17
    $region16: #{tpu_custom_call.1} parent=1 // pred_region
      _
    $region17: #{tpu_custom_call.1} parent=1 // pred_fallthru
      _
    // Predicated region
    $region18: #{tpu_custom_call.1} parent=1 // pred_check
      _
    $region19: #{tpu_custom_call.1} parent=1 // pred_check_branch
      %37 = sbr.rel (0) target = $region21
    $region20: #{tpu_custom_call.1} parent=1 // pred_region
      _
    $region21: #{tpu_custom_call.1} parent=1 // pred_fallthru
      _
    // Predicated region
    $region22: #{tpu_custom_call.1} parent=1 // pred_check
      _
    $region23: #{tpu_custom_call.1} parent=1 // pred_check_branch
      %39 = sbr.rel (0) target = $region25
    $region24: #{tpu_custom_call.1} parent=1 // pred_region
      _
    $region25: #{tpu_custom_call.1} parent=1 // pred_fallthru
      _
    // Predicated region
    $region26: #{tpu_custom_call.1} parent=1 // pred_check
      _
    $region27: #{tpu_custom_call.1} parent=1 // pred_check_branch
      %41 = sbr.rel (0) target = $region29
    $region28: #{tpu_custom_call.1} parent=1 // pred_region
      _
    $region29: #{tpu_custom_call.1} parent=1 // pred_fallthru
      _
    %s42 = sadd.s32 0, 0
    %s43 = smul.u32 4, %s42
    %p44 = scmp.lt.s32.totalorder %s43, 3
    %s45 = scalar_select %p44, %s43, 3
    %s46 = smul.addr %s45, 4
    %s47 = scalar_lea.vmem %s0, %s46
    %s48 = sadd.s32 0, 0
    %s49 = smul.u32 4, %s48
    %p50 = scmp.lt.s32.totalorder %s49, 3
    %s51 = scalar_select %p50, %s49, 3
    %s52 = smul.addr %s51, 4
    %s53 = scalar_lea.vmem %s0, %s52
    %s54 = sadd.s32 0, 0
    %s55 = smul.u32 4, %s54
    %s56 = sadd.s32 0, 0
    %s57 = smul.u32 4, %s56
    %s58 = sadd.s32 0, 0
    %s59 = smul.u32 4, %s58
    %p60 = scmp.eq.s32.totalorder 0, 0
    // Predicated region
    $region30: #{tpu_custom_call.1} parent=1 // pred_check
      %p61 = pneg %p60
    $region31: #{tpu_custom_call.1} parent=1 // pred_check_branch
      %63 = sbr.rel (%p61) target = $region33
    $region32: #{tpu_custom_call.1} parent=1 // pred_region
      %64 = vst [vmem:[#allocation6] sm:$0x1] 0.0
      %65 = vst [vmem:[#allocation7] sm:$0x1] 0.0
      %vm66 = vcmask 326656
      %67 = vst.msk [vmem:[%s11] sm:$0xff] %vm66, 0.0
      %68 = vst.msk [vmem:[%s11 + $0x8] sm:$0xff] %vm66, 0.0
      %69 = vst.msk [vmem:[%s11 + $0x10] sm:$0xff] %vm66, 0.0
      %vm70 = vcmask 319488
      %71 = vst.msk [vmem:[%s11 + $0x18] sm:$0x1] %vm70, 0.0
    $region33: #{tpu_custom_call.1} parent=1 // pred_fallthru
      _
    %v72 = vld [vmem:[%s1] sm:$0xf]
    %v73 = vld [vmem:[%s53] sm:$0xff]
    %v74 = vld [vmem:[%s53 + $0x8] sm:$0xff]
    %76 = vset.pattern.permute.xlu0 2
    %77 = vperm.xlu0 %76, %v72
    %v78 = vpop.permute.xlu0 %77
    %v80 = vunpack.c.l.s4 839922192
    %v81 = vunpack.c.0.s8 %v80
    %v82 = vlaneseq
    %v83 = vshrl.u32 %v82, 7
    %v84 = vsub.s32 %v81, %v83
    %v85 = vrot.slane %v78, %v84
    %v87 = vadd.f32 %v73, %v85
    %v88 = vadd.f32 %v74, %v85
    %v89 = vtanh.pop %v87
    %v90 = vtanh.pop %v88
    %91 = vset.pattern.permute.xlu0 0
    %92 = vperm.xlu0 %91, %v72
    %v93 = vpop.permute.xlu0 %92
    %v95 = vunpack.c.l.s4 839922192
    %v96 = vunpack.c.0.s8 %v95
    %v97 = vlaneseq
    %v98 = vshrl.u32 %v97, 7
    %v99 = vsub.s32 %v96, %v98
    %v100 = vrot.slane %v93, %v99
    %v102 = vmul.f32 %v89, %v100
    %v103 = vmul.f32 %v90, %v100
    %104 = vset.pattern.permute.xlu0 1
    %105 = vperm.xlu0 %104, %v72
    %v106 = vpop.permute.xlu0 %105
    %v108 = vunpack.c.l.s4 839922192
    %v109 = vunpack.c.0.s8 %v108
    %v110 = vlaneseq
    %v111 = vshrl.u32 %v110, 7
    %v112 = vsub.s32 %v109, %v111
    %v113 = vrot.slane %v106, %v112
    %v115 = vsub.f32 %v102, %v113
    %v116 = vsub.f32 %v103, %v113
    %v117 = vround.ne.pseudo %v115
    %v118 = vround.ne.pseudo %v116
    %119 = vset.pattern.permute.xlu0 5
    %120 = vperm.xlu0 %119, %v72
    %v121 = vpop.permute.xlu0 %120
    %v123 = vunpack.c.l.s4 839922192
    %v124 = vunpack.c.0.s8 %v123
    %v125 = vlaneseq
    %v126 = vshrl.u32 %v125, 7
    %v127 = vsub.s32 %v124, %v126
    %v128 = vrot.slane %v121, %v127
    %v130 = vmul.f32 %v117, %v128
    %v131 = vmul.f32 %v118, %v128
    %132 = vst [vmem:[#allocation2] sm:$0xff] %v130
    %133 = vst [vmem:[#allocation2 + $0x8] sm:$0xff] %v131
    %134 = vset.pattern.permute.xlu0 3
    %135 = vperm.xlu0 %134, %v72
    %v136 = vpop.permute.xlu0 %135
    %v138 = vunpack.c.l.s4 839922192
    %v139 = vunpack.c.0.s8 %v138
    %v140 = vlaneseq
    %v141 = vshrl.u32 %v140, 7
    %v142 = vsub.s32 %v139, %v141
    %v143 = vrot.slane %v136, %v142
    %v145 = vadd.f32 %v117, %v143
    %v146 = vadd.f32 %v118, %v143
    %147 = vset.pattern.permute.xlu0 4
    %148 = vperm.xlu0 %147, %v72
    %v149 = vpop.permute.xlu0 %148
    %v151 = vunpack.c.l.s4 839922192
    %v152 = vunpack.c.0.s8 %v151
    %v153 = vlaneseq
    %v154 = vshrl.u32 %v153, 7
    %v155 = vsub.s32 %v152, %v154
    %v156 = vrot.slane %v149, %v155
    %v158 = vmul.f32 %v145, %v156
    %v159 = vmul.f32 %v146, %v156
    %v162 = vcombine.high %v158, %v158
    %v163 = vcombine.high %v159, %v159
    %vm166 = vcmask 1043456
    %v167 = vsel %vm166, %v158, 0.0
    %v168 = vrot.slane %v167, 4
    %v169 = vadd.f32 %v167, %v168
    %v170 = vrot.slane %v169, 2
    %v171 = vadd.f32 %v169, %v170
    %v172 = vrot.slane %v171, 1
    %v173 = vadd.f32 %v171, %v172
    %v174 = vsel %vm166, %v162, 0.0
    %v175 = vrot.slane %v174, 4
    %v176 = vadd.f32 %v174, %v175
    %v177 = vrot.slane %v176, 2
    %v178 = vadd.f32 %v176, %v177
    %v179 = vrot.slane %v178, 1
    %v180 = vadd.f32 %v178, %v179
    %v181 = vsel %vm166, %v159, 0.0
    %v182 = vrot.slane %v181, 4
    %v183 = vadd.f32 %v181, %v182
    %v184 = vrot.slane %v183, 2
    %v185 = vadd.f32 %v183, %v184
    %v186 = vrot.slane %v185, 1
    %v187 = vadd.f32 %v185, %v186
    %v188 = vsel %vm166, %v163, 0.0
    %v189 = vrot.slane %v188, 4
    %v190 = vadd.f32 %v188, %v189
    %v191 = vrot.slane %v190, 2
    %v192 = vadd.f32 %v190, %v191
    %v193 = vrot.slane %v192, 1
    %v194 = vadd.f32 %v192, %v193
    %v195 = vcvt.f32.s32.to.zero.pseudo %v173
    %v196 = vcvt.f32.s32.to.zero.pseudo %v180
    %v197 = vcvt.f32.s32.to.zero.pseudo %v187
    %v198 = vcvt.f32.s32.to.zero.pseudo %v194
    %v199 = vcombine.low %v195, %v196
    %v200 = vcombine.low %v197, %v198
    %v202 = vunpack.c.l.s4 1966171168
    %v203 = vunpack.c.0.s8 %v202
    %v204 = vlaneseq
    %v205 = vshrl.u32 %v204, 7
    %v206 = vsub.s32 %v203, %v205
    %v207 = vrot.slane %v199, %v206
    %v209 = vunpack.c.l.s4 1966171168
    %v210 = vunpack.c.0.s8 %v209
    %v211 = vlaneseq
    %v212 = vshrl.u32 %v211, 7
    %v213 = vsub.s32 %v210, %v212
    %v214 = vrot.slane %v200, %v213
    %v215 = vcombine.low %v207, %v214
    %v217 = vunpack.c.l.s4 1966171168
    %v218 = vunpack.c.0.s8 %v217
    %v219 = vlaneseq
    %v220 = vshrl.u32 %v219, 7
    %v221 = vsub.s32 %v218, %v220
    %v222 = vrot.slane %v215, %v221
    %v223 = vlaneseq
    %vm224 = vcmp.ge.s32.totalorder %v223, 0
    %vm225 = vcmp.lt.s32.totalorder %v223, 512
    %vm226 = vmand %vm224, %vm225
    %227 = vst.msk [vmem:[#allocation4] sm:$0xf] %vm226, %v222
    %v228 = vsub.f32 %v73, %v130
    %v229 = vsub.f32 %v74, %v131
    %v230 = vmul.f32 %v228, %v228
    %v231 = vmul.f32 %v229, %v229
    %v234 = vcombine.high %v230, %v230
    %v235 = vcombine.high %v231, %v231
    %v238 = vsel %vm166, %v230, 0.0
    %v239 = vrot.slane %v238, 4
    %v240 = vadd.f32 %v238, %v239
    %v241 = vrot.slane %v240, 2
    %v242 = vadd.f32 %v240, %v241
    %v243 = vrot.slane %v242, 1
    %v244 = vadd.f32 %v242, %v243
    %v245 = vsel %vm166, %v234, 0.0
    %v246 = vrot.slane %v245, 4
    %v247 = vadd.f32 %v245, %v246
    %v248 = vrot.slane %v247, 2
    %v249 = vadd.f32 %v247, %v248
    %v250 = vrot.slane %v249, 1
    %v251 = vadd.f32 %v249, %v250
    %v252 = vsel %vm166, %v231, 0.0
    %v253 = vrot.slane %v252, 4
    %v254 = vadd.f32 %v252, %v253
    %v255 = vrot.slane %v254, 2
    %v256 = vadd.f32 %v254, %v255
    %v257 = vrot.slane %v256, 1
    %v258 = vadd.f32 %v256, %v257
    %v259 = vsel %vm166, %v235, 0.0
    %v260 = vrot.slane %v259, 4
    %v261 = vadd.f32 %v259, %v260
    %v262 = vrot.slane %v261, 2
    %v263 = vadd.f32 %v261, %v262
    %v264 = vrot.slane %v263, 1
    %v265 = vadd.f32 %v263, %v264
    %v266 = vld [vmem:[%s2] sm:$0xff]
    %v267 = vld [vmem:[%s2 + $0x8] sm:$0xff]
    %v268 = vld [vmem:[%s2 + $0x10] sm:$0xff]
    %v269 = vld [vmem:[%s2 + $0x18] sm:$0xff]
    %271 = vset.pattern.permute.xlu0 0
    %272 = vperm.xlu0 %271, %v266
    %v273 = vpop.permute.xlu0 %272
    %v277 = vlaneseq
    %v278 = vshrl.u32 %v277, 7
    %v279 = vsub.s32 0, %v278
    %v280 = vrot.slane %v73, %v279
    %v281 = vlaneseq
    %v282 = vshrl.u32 %v281, 7
    %v283 = vsub.s32 4, %v282
    %v284 = vrot.slane %v73, %v283
    %v285 = vlaneseq
    %v286 = vshrl.u32 %v285, 7
    %v287 = vsub.s32 0, %v286
    %v288 = vrot.slane %v74, %v287
    %v289 = vlaneseq
    %v290 = vshrl.u32 %v289, 7
    %v291 = vsub.s32 4, %v290
    %v292 = vrot.slane %v74, %v291
    %v297 = vlaneseq
    %v298 = vshrl.u32 %v297, 7
    %v299 = vsub.s32 0, %v298
    %v300 = vrot.slane %v280, %v299
    %v301 = vlaneseq
    %v302 = vshrl.u32 %v301, 7
    %v303 = vsub.s32 0, %v302
    %v304 = vrot.slane %v284, %v303
    %v305 = vlaneseq
    %v306 = vshrl.u32 %v305, 7
    %v307 = vsub.s32 0, %v306
    %v308 = vrot.slane %v288, %v307
    %v309 = vlaneseq
    %v310 = vshrl.u32 %v309, 7
    %v311 = vsub.s32 0, %v310
    %v312 = vrot.slane %v292, %v311
    %v313 = vmul.f32 %v273, %v300
    %v314 = vmul.f32 %v273, %v304
    %v315 = vmul.f32 %v273, %v308
    %v316 = vmul.f32 %v273, %v312
    %v317 = vrot.slane %v313, 4
    %v318 = vmax.f32 %v313, %v317
    %v319 = vrot.slane %v318, 2
    %v320 = vmax.f32 %v318, %v319
    %v321 = vrot.slane %v320, 1
    %v322 = vmax.f32 %v320, %v321
    %v323 = vrot.slane %v314, 4
    %v324 = vmax.f32 %v314, %v323
    %v325 = vrot.slane %v324, 2
    %v326 = vmax.f32 %v324, %v325
    %v327 = vrot.slane %v326, 1
    %v328 = vmax.f32 %v326, %v327
    %v329 = vrot.slane %v315, 4
    %v330 = vmax.f32 %v315, %v329
    %v331 = vrot.slane %v330, 2
    %v332 = vmax.f32 %v330, %v331
    %v333 = vrot.slane %v332, 1
    %v334 = vmax.f32 %v332, %v333
    %v335 = vrot.slane %v316, 4
    %v336 = vmax.f32 %v316, %v335
    %v337 = vrot.slane %v336, 2
    %v338 = vmax.f32 %v336, %v337
    %v339 = vrot.slane %v338, 1
    %v340 = vmax.f32 %v338, %v339
    %v341 = vsub.f32 %v313, %v322
    %v342 = vsub.f32 %v314, %v328
    %v343 = vsub.f32 %v315, %v334
    %v344 = vsub.f32 %v316, %v340
    %v345 = vmul.f32 %v341, 1.442695
    %v346 = vpow.pop %v345
    %v347 = vmul.f32 %v342, 1.442695
    %v348 = vpow.pop %v347
    %v349 = vmul.f32 %v343, 1.442695
    %v350 = vpow.pop %v349
    %v351 = vmul.f32 %v344, 1.442695
    %v352 = vpow.pop %v351
    %v353 = vrot.slane %v346, 4
    %v354 = vadd.f32 %v346, %v353
    %v355 = vrot.slane %v354, 2
    %v356 = vadd.f32 %v354, %v355
    %v357 = vrot.slane %v356, 1
    %v358 = vadd.f32 %v356, %v357
    %v359 = vrot.slane %v348, 4
    %v360 = vadd.f32 %v348, %v359
    %v361 = vrot.slane %v360, 2
    %v362 = vadd.f32 %v360, %v361
    %v363 = vrot.slane %v362, 1
    %v364 = vadd.f32 %v362, %v363
    %v365 = vrot.slane %v350, 4
    %v366 = vadd.f32 %v350, %v365
    %v367 = vrot.slane %v366, 2
    %v368 = vadd.f32 %v366, %v367
    %v369 = vrot.slane %v368, 1
    %v370 = vadd.f32 %v368, %v369
    %v371 = vrot.slane %v352, 4
    %v372 = vadd.f32 %v352, %v371
    %v373 = vrot.slane %v372, 2
    %v374 = vadd.f32 %v372, %v373
    %v375 = vrot.slane %v374, 1
    %v376 = vadd.f32 %v374, %v375
    %v377 = vrcp.pop %v358
    %v378 = vmul.f32 1.0, %v377
    %v379 = vrcp.pop %v364
    %v380 = vmul.f32 1.0, %v379
    %v381 = vrcp.pop %v370
    %v382 = vmul.f32 1.0, %v381
    %v383 = vrcp.pop %v376
    %v384 = vmul.f32 1.0, %v383
    %v385 = vlog2.pop %v358
    %v386 = vmul.f32 %v385, 0.6931472
    %v387 = vlog2.pop %v364
    %v388 = vmul.f32 %v387, 0.6931472
    %v389 = vlog2.pop %v370
    %v390 = vmul.f32 %v389, 0.6931472
    %v391 = vlog2.pop %v376
    %v392 = vmul.f32 %v391, 0.6931472
    %v393 = vmul.f32 %v346, %v341
    %v394 = vmul.f32 %v348, %v342
    %v395 = vmul.f32 %v350, %v343
    %v396 = vmul.f32 %v352, %v344
    %v397 = vrot.slane %v393, 4
    %v398 = vadd.f32 %v393, %v397
    %v399 = vrot.slane %v398, 2
    %v400 = vadd.f32 %v398, %v399
    %v401 = vrot.slane %v400, 1
    %v402 = vadd.f32 %v400, %v401
    %v403 = vrot.slane %v394, 4
    %v404 = vadd.f32 %v394, %v403
    %v405 = vrot.slane %v404, 2
    %v406 = vadd.f32 %v404, %v405
    %v407 = vrot.slane %v406, 1
    %v408 = vadd.f32 %v406, %v407
    %v409 = vrot.slane %v395, 4
    %v410 = vadd.f32 %v395, %v409
    %v411 = vrot.slane %v410, 2
    %v412 = vadd.f32 %v410, %v411
    %v413 = vrot.slane %v412, 1
    %v414 = vadd.f32 %v412, %v413
    %v415 = vrot.slane %v396, 4
    %v416 = vadd.f32 %v396, %v415
    %v417 = vrot.slane %v416, 2
    %v418 = vadd.f32 %v416, %v417
    %v419 = vrot.slane %v418, 1
    %v420 = vadd.f32 %v418, %v419
    %v421 = vmul.f32 %v402, %v378
    %v422 = vmul.f32 %v408, %v380
    %v423 = vmul.f32 %v414, %v382
    %v424 = vmul.f32 %v420, %v384
    %v425 = vsub.f32 %v386, %v421
    %v426 = vsub.f32 %v388, %v422
    %v427 = vsub.f32 %v390, %v423
    %v428 = vsub.f32 %v392, %v424
    %v429 = vmul.f32 %v346, %v378
    %v430 = vmul.f32 %v348, %v380
    %v431 = vmul.f32 %v350, %v382
    %v432 = vmul.f32 %v352, %v384
    %434 = vset.pattern.permute.xlu0 0
    %435 = vperm.xlu0 %434, %v267
    %v436 = vpop.permute.xlu0 %435
    %v438 = vlaneseq
    %v439 = vshrl.u32 %v438, 7
    %v440 = vsub.s32 1, %v439
    %v441 = vrot.slane %v73, %v440
    %v442 = vlaneseq
    %v443 = vshrl.u32 %v442, 7
    %v444 = vsub.s32 5, %v443
    %v445 = vrot.slane %v73, %v444
    %v446 = vlaneseq
    %v447 = vshrl.u32 %v446, 7
    %v448 = vsub.s32 1, %v447
    %v449 = vrot.slane %v74, %v448
    %v450 = vlaneseq
    %v451 = vshrl.u32 %v450, 7
    %v452 = vsub.s32 5, %v451
    %v453 = vrot.slane %v74, %v452
    %v458 = vlaneseq
    %v459 = vshrl.u32 %v458, 7
    %v460 = vsub.s32 1, %v459
    %v461 = vrot.slane %v441, %v460
    %v462 = vlaneseq
    %v463 = vshrl.u32 %v462, 7
    %v464 = vsub.s32 1, %v463
    %v465 = vrot.slane %v445, %v464
    %v466 = vlaneseq
    %v467 = vshrl.u32 %v466, 7
    %v468 = vsub.s32 1, %v467
    %v469 = vrot.slane %v449, %v468
    %v470 = vlaneseq
    %v471 = vshrl.u32 %v470, 7
    %v472 = vsub.s32 1, %v471
    %v473 = vrot.slane %v453, %v472
    %v474 = vmul.f32 %v436, %v461
    %v475 = vmul.f32 %v436, %v465
    %v476 = vmul.f32 %v436, %v469
    %v477 = vmul.f32 %v436, %v473
    %vm478 = vcmask 1044480
    %v479 = vsel %vm478, %v474, -inf
    %v480 = vrot.slane %v479, 4
    %v481 = vmax.f32 %v479, %v480
    %v482 = vrot.slane %v481, 2
    %v483 = vmax.f32 %v481, %v482
    %v484 = vrot.slane %v483, 1
    %v485 = vmax.f32 %v483, %v484
    %v486 = vsel %vm478, %v475, -inf
    %v487 = vrot.slane %v486, 4
    %v488 = vmax.f32 %v486, %v487
    %v489 = vrot.slane %v488, 2
    %v490 = vmax.f32 %v488, %v489
    %v491 = vrot.slane %v490, 1
    %v492 = vmax.f32 %v490, %v491
    %v493 = vsel %vm478, %v476, -inf
    %v494 = vrot.slane %v493, 4
    %v495 = vmax.f32 %v493, %v494
    %v496 = vrot.slane %v495, 2
    %v497 = vmax.f32 %v495, %v496
    %v498 = vrot.slane %v497, 1
    %v499 = vmax.f32 %v497, %v498
    %v500 = vsel %vm478, %v477, -inf
    %v501 = vrot.slane %v500, 4
    %v502 = vmax.f32 %v500, %v501
    %v503 = vrot.slane %v502, 2
    %v504 = vmax.f32 %v502, %v503
    %v505 = vrot.slane %v504, 1
    %v506 = vmax.f32 %v504, %v505
    %v507 = vsub.f32 %v474, %v485
    %v508 = vsub.f32 %v475, %v492
    %v509 = vsub.f32 %v476, %v499
    %v510 = vsub.f32 %v477, %v506
    %v511 = vmul.f32 %v507, 1.442695
    %v512 = vpow.pop %v511
    %v513 = vmul.f32 %v508, 1.442695
    %v514 = vpow.pop %v513
    %v515 = vmul.f32 %v509, 1.442695
    %v516 = vpow.pop %v515
    %v517 = vmul.f32 %v510, 1.442695
    %v518 = vpow.pop %v517
    %v519 = vsel %vm478, %v512, 0.0
    %v520 = vrot.slane %v519, 4
    %v521 = vadd.f32 %v519, %v520
    %v522 = vrot.slane %v521, 2
    %v523 = vadd.f32 %v521, %v522
    %v524 = vrot.slane %v523, 1
    %v525 = vadd.f32 %v523, %v524
    %v526 = vsel %vm478, %v514, 0.0
    %v527 = vrot.slane %v526, 4
    %v528 = vadd.f32 %v526, %v527
    %v529 = vrot.slane %v528, 2
    %v530 = vadd.f32 %v528, %v529
    %v531 = vrot.slane %v530, 1
    %v532 = vadd.f32 %v530, %v531
    %v533 = vsel %vm478, %v516, 0.0
    %v534 = vrot.slane %v533, 4
    %v535 = vadd.f32 %v533, %v534
    %v536 = vrot.slane %v535, 2
    %v537 = vadd.f32 %v535, %v536
    %v538 = vrot.slane %v537, 1
    %v539 = vadd.f32 %v537, %v538
    %v540 = vsel %vm478, %v518, 0.0
    %v541 = vrot.slane %v540, 4
    %v542 = vadd.f32 %v540, %v541
    %v543 = vrot.slane %v542, 2
    %v544 = vadd.f32 %v542, %v543
    %v545 = vrot.slane %v544, 1
    %v546 = vadd.f32 %v544, %v545
    %v547 = vrcp.pop %v525
    %v548 = vmul.f32 1.0, %v547
    %v549 = vrcp.pop %v532
    %v550 = vmul.f32 1.0, %v549
    %v551 = vrcp.pop %v539
    %v552 = vmul.f32 1.0, %v551
    %v553 = vrcp.pop %v546
    %v554 = vmul.f32 1.0, %v553
    %v555 = vlog2.pop %v525
    %v556 = vmul.f32 %v555, 0.6931472
    %v557 = vlog2.pop %v532
    %v558 = vmul.f32 %v557, 0.6931472
    %v559 = vlog2.pop %v539
    %v560 = vmul.f32 %v559, 0.6931472
    %v561 = vlog2.pop %v546
    %v562 = vmul.f32 %v561, 0.6931472
    %v563 = vmul.f32 %v512, %v507
    %v564 = vmul.f32 %v514, %v508
    %v565 = vmul.f32 %v516, %v509
    %v566 = vmul.f32 %v518, %v510
    %v567 = vsel %vm478, %v563, 0.0
    %v568 = vrot.slane %v567, 4
    %v569 = vadd.f32 %v567, %v568
    %v570 = vrot.slane %v569, 2
    %v571 = vadd.f32 %v569, %v570
    %v572 = vrot.slane %v571, 1
    %v573 = vadd.f32 %v571, %v572
    %v574 = vsel %vm478, %v564, 0.0
    %v575 = vrot.slane %v574, 4
    %v576 = vadd.f32 %v574, %v575
    %v577 = vrot.slane %v576, 2
    %v578 = vadd.f32 %v576, %v577
    %v579 = vrot.slane %v578, 1
    %v580 = vadd.f32 %v578, %v579
    %v581 = vsel %vm478, %v565, 0.0
    %v582 = vrot.slane %v581, 4
    %v583 = vadd.f32 %v581, %v582
    %v584 = vrot.slane %v583, 2
    %v585 = vadd.f32 %v583, %v584
    %v586 = vrot.slane %v585, 1
    %v587 = vadd.f32 %v585, %v586
    %v588 = vsel %vm478, %v566, 0.0
    %v589 = vrot.slane %v588, 4
    %v590 = vadd.f32 %v588, %v589
    %v591 = vrot.slane %v590, 2
    %v592 = vadd.f32 %v590, %v591
    %v593 = vrot.slane %v592, 1
    %v594 = vadd.f32 %v592, %v593
    %v595 = vmul.f32 %v573, %v548
    %v596 = vmul.f32 %v580, %v550
    %v597 = vmul.f32 %v587, %v552
    %v598 = vmul.f32 %v594, %v554
    %v599 = vsub.f32 %v556, %v595
    %v600 = vsub.f32 %v558, %v596
    %v601 = vsub.f32 %v560, %v597
    %v602 = vsub.f32 %v562, %v598
    %v603 = vmul.f32 %v512, %v548
    %v604 = vmul.f32 %v514, %v550
    %v605 = vmul.f32 %v516, %v552
    %v606 = vmul.f32 %v518, %v554
    %608 = vset.pattern.permute.xlu0 0
    %609 = vperm.xlu0 %608, %v268
    %v610 = vpop.permute.xlu0 %609
    %v612 = vlaneseq
    %v613 = vshrl.u32 %v612, 7
    %v614 = vsub.s32 2, %v613
    %v615 = vrot.slane %v73, %v614
    %v616 = vlaneseq
    %v617 = vshrl.u32 %v616, 7
    %v618 = vsub.s32 6, %v617
    %v619 = vrot.slane %v73, %v618
    %v620 = vlaneseq
    %v621 = vshrl.u32 %v620, 7
    %v622 = vsub.s32 2, %v621
    %v623 = vrot.slane %v74, %v622
    %v624 = vlaneseq
    %v625 = vshrl.u32 %v624, 7
    %v626 = vsub.s32 6, %v625
    %v627 = vrot.slane %v74, %v626
    %v632 = vlaneseq
    %v633 = vshrl.u32 %v632, 7
    %v634 = vsub.s32 2, %v633
    %v635 = vrot.slane %v615, %v634
    %v636 = vlaneseq
    %v637 = vshrl.u32 %v636, 7
    %v638 = vsub.s32 2, %v637
    %v639 = vrot.slane %v619, %v638
    %v640 = vlaneseq
    %v641 = vshrl.u32 %v640, 7
    %v642 = vsub.s32 2, %v641
    %v643 = vrot.slane %v623, %v642
    %v644 = vlaneseq
    %v645 = vshrl.u32 %v644, 7
    %v646 = vsub.s32 2, %v645
    %v647 = vrot.slane %v627, %v646
    %v648 = vmul.f32 %v610, %v635
    %v649 = vmul.f32 %v610, %v639
    %v650 = vmul.f32 %v610, %v643
    %v651 = vmul.f32 %v610, %v647
    %v652 = vsel %vm478, %v648, -inf
    %v653 = vrot.slane %v652, 4
    %v654 = vmax.f32 %v652, %v653
    %v655 = vrot.slane %v654, 2
    %v656 = vmax.f32 %v654, %v655
    %v657 = vrot.slane %v656, 1
    %v658 = vmax.f32 %v656, %v657
    %v659 = vsel %vm478, %v649, -inf
    %v660 = vrot.slane %v659, 4
    %v661 = vmax.f32 %v659, %v660
    %v662 = vrot.slane %v661, 2
    %v663 = vmax.f32 %v661, %v662
    %v664 = vrot.slane %v663, 1
    %v665 = vmax.f32 %v663, %v664
    %v666 = vsel %vm478, %v650, -inf
    %v667 = vrot.slane %v666, 4
    %v668 = vmax.f32 %v666, %v667
    %v669 = vrot.slane %v668, 2
    %v670 = vmax.f32 %v668, %v669
    %v671 = vrot.slane %v670, 1
    %v672 = vmax.f32 %v670, %v671
    %v673 = vsel %vm478, %v651, -inf
    %v674 = vrot.slane %v673, 4
    %v675 = vmax.f32 %v673, %v674
    %v676 = vrot.slane %v675, 2
    %v677 = vmax.f32 %v675, %v676
    %v678 = vrot.slane %v677, 1
    %v679 = vmax.f32 %v677, %v678
    %v680 = vsub.f32 %v648, %v658
    %v681 = vsub.f32 %v649, %v665
    %v682 = vsub.f32 %v650, %v672
    %v683 = vsub.f32 %v651, %v679
    %v684 = vmul.f32 %v680, 1.442695
    %v685 = vpow.pop %v684
    %v686 = vmul.f32 %v681, 1.442695
    %v687 = vpow.pop %v686
    %v688 = vmul.f32 %v682, 1.442695
    %v689 = vpow.pop %v688
    %v690 = vmul.f32 %v683, 1.442695
    %v691 = vpow.pop %v690
    %v692 = vsel %vm478, %v685, 0.0
    %v693 = vrot.slane %v692, 4
    %v694 = vadd.f32 %v692, %v693
    %v695 = vrot.slane %v694, 2
    %v696 = vadd.f32 %v694, %v695
    %v697 = vrot.slane %v696, 1
    %v698 = vadd.f32 %v696, %v697
    %v699 = vsel %vm478, %v687, 0.0
    %v700 = vrot.slane %v699, 4
    %v701 = vadd.f32 %v699, %v700
    %v702 = vrot.slane %v701, 2
    %v703 = vadd.f32 %v701, %v702
    %v704 = vrot.slane %v703, 1
    %v705 = vadd.f32 %v703, %v704
    %v706 = vsel %vm478, %v689, 0.0
    %v707 = vrot.slane %v706, 4
    %v708 = vadd.f32 %v706, %v707
    %v709 = vrot.slane %v708, 2
    %v710 = vadd.f32 %v708, %v709
    %v711 = vrot.slane %v710, 1
    %v712 = vadd.f32 %v710, %v711
    %v713 = vsel %vm478, %v691, 0.0
    %v714 = vrot.slane %v713, 4
    %v715 = vadd.f32 %v713, %v714
    %v716 = vrot.slane %v715, 2
    %v717 = vadd.f32 %v715, %v716
    %v718 = vrot.slane %v717, 1
    %v719 = vadd.f32 %v717, %v718
    %v720 = vrcp.pop %v698
    %v721 = vmul.f32 1.0, %v720
    %v722 = vrcp.pop %v705
    %v723 = vmul.f32 1.0, %v722
    %v724 = vrcp.pop %v712
    %v725 = vmul.f32 1.0, %v724
    %v726 = vrcp.pop %v719
    %v727 = vmul.f32 1.0, %v726
    %v728 = vlog2.pop %v698
    %v729 = vmul.f32 %v728, 0.6931472
    %v730 = vlog2.pop %v705
    %v731 = vmul.f32 %v730, 0.6931472
    %v732 = vlog2.pop %v712
    %v733 = vmul.f32 %v732, 0.6931472
    %v734 = vlog2.pop %v719
    %v735 = vmul.f32 %v734, 0.6931472
    %v736 = vmul.f32 %v685, %v680
    %v737 = vmul.f32 %v687, %v681
    %v738 = vmul.f32 %v689, %v682
    %v739 = vmul.f32 %v691, %v683
    %v740 = vsel %vm478, %v736, 0.0
    %v741 = vrot.slane %v740, 4
    %v742 = vadd.f32 %v740, %v741
    %v743 = vrot.slane %v742, 2
    %v744 = vadd.f32 %v742, %v743
    %v745 = vrot.slane %v744, 1
    %v746 = vadd.f32 %v744, %v745
    %v747 = vsel %vm478, %v737, 0.0
    %v748 = vrot.slane %v747, 4
    %v749 = vadd.f32 %v747, %v748
    %v750 = vrot.slane %v749, 2
    %v751 = vadd.f32 %v749, %v750
    %v752 = vrot.slane %v751, 1
    %v753 = vadd.f32 %v751, %v752
    %v754 = vsel %vm478, %v738, 0.0
    %v755 = vrot.slane %v754, 4
    %v756 = vadd.f32 %v754, %v755
    %v757 = vrot.slane %v756, 2
    %v758 = vadd.f32 %v756, %v757
    %v759 = vrot.slane %v758, 1
    %v760 = vadd.f32 %v758, %v759
    %v761 = vsel %vm478, %v739, 0.0
    %v762 = vrot.slane %v761, 4
    %v763 = vadd.f32 %v761, %v762
    %v764 = vrot.slane %v763, 2
    %v765 = vadd.f32 %v763, %v764
    %v766 = vrot.slane %v765, 1
    %v767 = vadd.f32 %v765, %v766
    %v768 = vmul.f32 %v746, %v721
    %v769 = vmul.f32 %v753, %v723
    %v770 = vmul.f32 %v760, %v725
    %v771 = vmul.f32 %v767, %v727
    %v772 = vsub.f32 %v729, %v768
    %v773 = vsub.f32 %v731, %v769
    %v774 = vsub.f32 %v733, %v770
    %v775 = vsub.f32 %v735, %v771
    %v776 = vmul.f32 %v685, %v721
    %v777 = vmul.f32 %v687, %v723
    %v778 = vmul.f32 %v689, %v725
    %v779 = vmul.f32 %v691, %v727
    %781 = vset.pattern.permute.xlu0 0
    %782 = vperm.xlu0 %781, %v269
    %v783 = vpop.permute.xlu0 %782
    %v785 = vlaneseq
    %v786 = vshrl.u32 %v785, 7
    %v787 = vsub.s32 3, %v786
    %v788 = vrot.slane %v73, %v787
    %v789 = vlaneseq
    %v790 = vshrl.u32 %v789, 7
    %v791 = vsub.s32 7, %v790
    %v792 = vrot.slane %v73, %v791
    %v793 = vlaneseq
    %v794 = vshrl.u32 %v793, 7
    %v795 = vsub.s32 3, %v794
    %v796 = vrot.slane %v74, %v795
    %v797 = vlaneseq
    %v798 = vshrl.u32 %v797, 7
    %v799 = vsub.s32 7, %v798
    %v800 = vrot.slane %v74, %v799
    %v805 = vlaneseq
    %v806 = vshrl.u32 %v805, 7
    %v807 = vsub.s32 3, %v806
    %v808 = vrot.slane %v788, %v807
    %v809 = vlaneseq
    %v810 = vshrl.u32 %v809, 7
    %v811 = vsub.s32 3, %v810
    %v812 = vrot.slane %v792, %v811
    %v813 = vlaneseq
    %v814 = vshrl.u32 %v813, 7
    %v815 = vsub.s32 3, %v814
    %v816 = vrot.slane %v796, %v815
    %v817 = vlaneseq
    %v818 = vshrl.u32 %v817, 7
    %v819 = vsub.s32 3, %v818
    %v820 = vrot.slane %v800, %v819
    %v821 = vmul.f32 %v783, %v808
    %v822 = vmul.f32 %v783, %v812
    %v823 = vmul.f32 %v783, %v816
    %v824 = vmul.f32 %v783, %v820
    %v825 = vsel %vm478, %v821, -inf
    %v826 = vrot.slane %v825, 4
    %v827 = vmax.f32 %v825, %v826
    %v828 = vrot.slane %v827, 2
    %v829 = vmax.f32 %v827, %v828
    %v830 = vrot.slane %v829, 1
    %v831 = vmax.f32 %v829, %v830
    %v832 = vsel %vm478, %v822, -inf
    %v833 = vrot.slane %v832, 4
    %v834 = vmax.f32 %v832, %v833
    %v835 = vrot.slane %v834, 2
    %v836 = vmax.f32 %v834, %v835
    %v837 = vrot.slane %v836, 1
    %v838 = vmax.f32 %v836, %v837
    %v839 = vsel %vm478, %v823, -inf
    %v840 = vrot.slane %v839, 4
    %v841 = vmax.f32 %v839, %v840
    %v842 = vrot.slane %v841, 2
    %v843 = vmax.f32 %v841, %v842
    %v844 = vrot.slane %v843, 1
    %v845 = vmax.f32 %v843, %v844
    %v846 = vsel %vm478, %v824, -inf
    %v847 = vrot.slane %v846, 4
    %v848 = vmax.f32 %v846, %v847
    %v849 = vrot.slane %v848, 2
    %v850 = vmax.f32 %v848, %v849
    %v851 = vrot.slane %v850, 1
    %v852 = vmax.f32 %v850, %v851
    %v853 = vsub.f32 %v821, %v831
    %v854 = vsub.f32 %v822, %v838
    %v855 = vsub.f32 %v823, %v845
    %v856 = vsub.f32 %v824, %v852
    %v857 = vmul.f32 %v853, 1.442695
    %v858 = vpow.pop %v857
    %v859 = vmul.f32 %v854, 1.442695
    %v860 = vpow.pop %v859
    %v861 = vmul.f32 %v855, 1.442695
    %v862 = vpow.pop %v861
    %v863 = vmul.f32 %v856, 1.442695
    %v864 = vpow.pop %v863
    %v865 = vsel %vm478, %v858, 0.0
    %v866 = vrot.slane %v865, 4
    %v867 = vadd.f32 %v865, %v866
    %v868 = vrot.slane %v867, 2
    %v869 = vadd.f32 %v867, %v868
    %v870 = vrot.slane %v869, 1
    %v871 = vadd.f32 %v869, %v870
    %v872 = vsel %vm478, %v860, 0.0
    %v873 = vrot.slane %v872, 4
    %v874 = vadd.f32 %v872, %v873
    %v875 = vrot.slane %v874, 2
    %v876 = vadd.f32 %v874, %v875
    %v877 = vrot.slane %v876, 1
    %v878 = vadd.f32 %v876, %v877
    %v879 = vsel %vm478, %v862, 0.0
    %v880 = vrot.slane %v879, 4
    %v881 = vadd.f32 %v879, %v880
    %v882 = vrot.slane %v881, 2
    %v883 = vadd.f32 %v881, %v882
    %v884 = vrot.slane %v883, 1
    %v885 = vadd.f32 %v883, %v884
    %v886 = vsel %vm478, %v864, 0.0
    %v887 = vrot.slane %v886, 4
    %v888 = vadd.f32 %v886, %v887
    %v889 = vrot.slane %v888, 2
    %v890 = vadd.f32 %v888, %v889
    %v891 = vrot.slane %v890, 1
    %v892 = vadd.f32 %v890, %v891
    %v893 = vrcp.pop %v871
    %v894 = vmul.f32 1.0, %v893
    %v895 = vrcp.pop %v878
    %v896 = vmul.f32 1.0, %v895
    %v897 = vrcp.pop %v885
    %v898 = vmul.f32 1.0, %v897
    %v899 = vrcp.pop %v892
    %v900 = vmul.f32 1.0, %v899
    %v901 = vlog2.pop %v871
    %v902 = vmul.f32 %v901, 0.6931472
    %v903 = vlog2.pop %v878
    %v904 = vmul.f32 %v903, 0.6931472
    %v905 = vlog2.pop %v885
    %v906 = vmul.f32 %v905, 0.6931472
    %v907 = vlog2.pop %v892
    %v908 = vmul.f32 %v907, 0.6931472
    %v909 = vmul.f32 %v858, %v853
    %v910 = vmul.f32 %v860, %v854
    %v911 = vmul.f32 %v862, %v855
    %v912 = vmul.f32 %v864, %v856
    %v913 = vsel %vm478, %v909, 0.0
    %v914 = vrot.slane %v913, 4
    %v915 = vadd.f32 %v913, %v914
    %v916 = vrot.slane %v915, 2
    %v917 = vadd.f32 %v915, %v916
    %v918 = vrot.slane %v917, 1
    %v919 = vadd.f32 %v917, %v918
    %v920 = vsel %vm478, %v910, 0.0
    %v921 = vrot.slane %v920, 4
    %v922 = vadd.f32 %v920, %v921
    %v923 = vrot.slane %v922, 2
    %v924 = vadd.f32 %v922, %v923
    %v925 = vrot.slane %v924, 1
    %v926 = vadd.f32 %v924, %v925
    %v927 = vsel %vm478, %v911, 0.0
    %v928 = vrot.slane %v927, 4
    %v929 = vadd.f32 %v927, %v928
    %v930 = vrot.slane %v929, 2
    %v931 = vadd.f32 %v929, %v930
    %v932 = vrot.slane %v931, 1
    %v933 = vadd.f32 %v931, %v932
    %v934 = vsel %vm478, %v912, 0.0
    %v935 = vrot.slane %v934, 4
    %v936 = vadd.f32 %v934, %v935
    %v937 = vrot.slane %v936, 2
    %v938 = vadd.f32 %v936, %v937
    %v939 = vrot.slane %v938, 1
    %v940 = vadd.f32 %v938, %v939
    %v941 = vmul.f32 %v919, %v894
    %v942 = vmul.f32 %v926, %v896
    %v943 = vmul.f32 %v933, %v898
    %v944 = vmul.f32 %v940, %v900
    %v945 = vsub.f32 %v902, %v941
    %v946 = vsub.f32 %v904, %v942
    %v947 = vsub.f32 %v906, %v943
    %v948 = vsub.f32 %v908, %v944
    %v949 = vmul.f32 %v858, %v894
    %v950 = vmul.f32 %v860, %v896
    %v951 = vmul.f32 %v862, %v898
    %v952 = vmul.f32 %v864, %v900
    %v953 = vadd.f32 %v425, %v599
    %v954 = vadd.f32 %v426, %v600
    %v955 = vadd.f32 %v427, %v601
    %v956 = vadd.f32 %v428, %v602
    %v957 = vadd.f32 %v772, %v945
    %v958 = vadd.f32 %v773, %v946
    %v959 = vadd.f32 %v774, %v947
    %v960 = vadd.f32 %v775, %v948
    %v961 = vadd.f32 %v953, %v957
    %v962 = vadd.f32 %v954, %v958
    %v963 = vadd.f32 %v955, %v959
    %v964 = vadd.f32 %v956, %v960
    %v965 = vld [vmem:[%s3] sm:$0xff]
    %v966 = vld [vmem:[%s3 + $0x8] sm:$0xff]
    %v967 = vld [vmem:[%s3 + $0x10] sm:$0xff]
    %v968 = vld [vmem:[%s3 + $0x18] sm:$0xff]
    %v969 = vld [vmem:[%s3 + $0x20] sm:$0xff]
    %vm970 = vcmask 64512
    %v972 = vsel %vm970, %v965, 0
    %v975 = vsel %vm970, %v966, 0
    %v978 = vsel %vm970, %v967, 0
    %v981 = vsel %vm970, %v968, 0
    %v984 = vsel %vm970, %v969, 0
    %986 = vmatprep.subr.mxu0 %v430
    %987 = vmatpush1.msra.mxu0 %v429
    %988 = vmatprep.subr.mxu0 0.0
    %989 = vmatpush1.msra.mxu0 0.0
    %990 = vmatprep.subr.mxu0 0.0
    %991 = vmatpush1.msra.mxu0 0.0
    %992 = vmatprep.subr.mxu0 0.0
    %993 = vmatpush1.msra.mxu0 0.0
    %994 = vmatprep.subr.mxu0 0.0
    %995 = vmatpush1.msra.mxu0 0.0
    %996 = vmatprep.subr.mxu0 0.0
    %997 = vmatpush1.msra.mxu0 0.0
    %998 = vmatprep.subr.mxu0 0.0
    %999 = vmatpush1.msra.mxu0 0.0
    %1000 = vmatprep.subr.mxu0 0.0
    %1001 = vmatpush1.msra.mxu0 0.0
    %1002 = vmatprep.subr.mxu0 0.0
    %1003 = vmatpush1.msra.mxu0 0.0
    %1004 = vmatprep.subr.mxu0 0.0
    %1005 = vmatpush1.msra.mxu0 0.0
    %1006 = vmatprep.subr.mxu0 0.0
    %1007 = vmatpush1.msra.mxu0 0.0
    %1008 = vmatprep.subr.mxu0 0.0
    %1009 = vmatpush1.msra.mxu0 0.0
    %1010 = vmatprep.subr.mxu0 0.0
    %1011 = vmatpush1.msra.mxu0 0.0
    %1012 = vmatprep.subr.mxu0 0.0
    %1013 = vmatpush1.msra.mxu0 0.0
    %1014 = vmatprep.subr.mxu0 0.0
    %1015 = vmatpush1.msra.mxu0 0.0
    %1016 = vmatprep.subr.mxu0 0.0
    %1017 = vmatpush1.msra.mxu0 0.0
    %1018 = vmatprep.subr.mxu0 0.0
    %1019 = vmatpush1.msra.mxu0 0.0
    %1020 = vmatprep.subr.mxu0 0.0
    %1021 = vmatpush1.msra.mxu0 0.0
    %1022 = vmatprep.subr.mxu0 0.0
    %1023 = vmatpush1.msra.mxu0 0.0
    %1024 = vmatprep.subr.mxu0 0.0
    %1025 = vmatpush1.msra.mxu0 0.0
    %1026 = vmatprep.subr.mxu0 0.0
    %1027 = vmatpush1.msra.mxu0 0.0
    %1028 = vmatprep.subr.mxu0 0.0
    %1029 = vmatpush1.msra.mxu0 0.0
    %1030 = vmatprep.subr.mxu0 0.0
    %1031 = vmatpush1.msra.mxu0 0.0
    %1032 = vmatprep.subr.mxu0 0.0
    %1033 = vmatpush1.msra.mxu0 0.0
    %1034 = vmatprep.subr.mxu0 0.0
    %1035 = vmatpush1.msra.mxu0 0.0
    %1036 = vmatprep.subr.mxu0 0.0
    %1037 = vmatpush1.msra.mxu0 0.0
    %1038 = vmatprep.subr.mxu0 0.0
    %1039 = vmatpush1.msra.mxu0 0.0
    %1040 = vmatprep.subr.mxu0 0.0
    %1041 = vmatpush1.msra.mxu0 0.0
    %1042 = vmatprep.subr.mxu0 0.0
    %1043 = vmatpush1.msra.mxu0 0.0
    %1044 = vmatprep.subr.mxu0 0.0
    %1045 = vmatpush1.msra.mxu0 0.0
    %1046 = vmatprep.subr.mxu0 0.0
    %1047 = vmatpush1.msra.mxu0 0.0
    %1048 = vmatprep.subr.mxu0 0.0
    %1049 = vmatpush1.msra.mxu0 0.0
    %1050 = vmatprep.mubr.f32.mxu0 0.0
    %1051 = vmatmul.mubr.f32.gmra.mrb[0].mxu0 %v972
    %v1052 = vpop.f32.mrb[0].mxu0
    %v1053 = vadd.f32 0.0, %v1052
    %v1054 = vpop.f32.mrb[0].mxu0
    %v1055 = vadd.f32 0.0, %v1054
    %1056 = vmatprep.mubr.f32.mxu0 0.0
    %1057 = vmatmul.mubr.f32.gmra.mrb[0].mxu0 %v975
    %v1058 = vpop.f32.mrb[0].mxu0
    %v1059 = vadd.f32 0.0, %v1058
    %v1060 = vpop.f32.mrb[0].mxu0
    %v1061 = vadd.f32 0.0, %v1060
    %1062 = vmatprep.mubr.f32.mxu0 0.0
    %1063 = vmatmul.mubr.f32.gmra.mrb[0].mxu0 %v978
    %v1064 = vpop.f32.mrb[0].mxu0
    %v1065 = vadd.f32 0.0, %v1064
    %v1066 = vpop.f32.mrb[0].mxu0
    %v1067 = vadd.f32 0.0, %v1066
    %1068 = vmatprep.mubr.f32.mxu0 0.0
    %1069 = vmatmul.mubr.f32.gmra.mrb[0].mxu0 %v981
    %v1070 = vpop.f32.mrb[0].mxu0
    %v1071 = vadd.f32 0.0, %v1070
    %v1072 = vpop.f32.mrb[0].mxu0
    %v1073 = vadd.f32 0.0, %v1072
    %1074 = vmatprep.mubr.f32.mxu0 0.0
    %1075 = vmatmul.mubr.f32.gmra.mrb[0].mxu0 %v984
    %v1076 = vpop.f32.mrb[0].mxu0
    %v1077 = vadd.f32 0.0, %v1076
    %v1078 = vpop.f32.mrb[0].mxu0
    %v1079 = vadd.f32 0.0, %v1078
    %1080 = vdwg.mxu0
    %1081 = vmatprep.subr.mxu0 %v432
    %1082 = vmatpush1.msra.mxu0 %v431
    %1083 = vmatprep.subr.mxu0 0.0
    %1084 = vmatpush1.msra.mxu0 0.0
    %1085 = vmatprep.subr.mxu0 0.0
    %1086 = vmatpush1.msra.mxu0 0.0
    %1087 = vmatprep.subr.mxu0 0.0
    %1088 = vmatpush1.msra.mxu0 0.0
    %1089 = vmatprep.subr.mxu0 0.0
    %1090 = vmatpush1.msra.mxu0 0.0
    %1091 = vmatprep.subr.mxu0 0.0
    %1092 = vmatpush1.msra.mxu0 0.0
    %1093 = vmatprep.subr.mxu0 0.0
    %1094 = vmatpush1.msra.mxu0 0.0
    %1095 = vmatprep.subr.mxu0 0.0
    %1096 = vmatpush1.msra.mxu0 0.0
    %1097 = vmatprep.subr.mxu0 0.0
    %1098 = vmatpush1.msra.mxu0 0.0
    %1099 = vmatprep.subr.mxu0 0.0
    %1100 = vmatpush1.msra.mxu0 0.0
    %1101 = vmatprep.subr.mxu0 0.0
    %1102 = vmatpush1.msra.mxu0 0.0
    %1103 = vmatprep.subr.mxu0 0.0
    %1104 = vmatpush1.msra.mxu0 0.0
    %1105 = vmatprep.subr.mxu0 0.0
    %1106 = vmatpush1.msra.mxu0 0.0
    %1107 = vmatprep.subr.mxu0 0.0
    %1108 = vmatpush1.msra.mxu0 0.0
    %1109 = vmatprep.subr.mxu0 0.0
    %1110 = vmatpush1.msra.mxu0 0.0
    %1111 = vmatprep.subr.mxu0 0.0
    %1112 = vmatpush1.msra.mxu0 0.0
    %1113 = vmatprep.subr.mxu0 0.0
    %1114 = vmatpush1.msra.mxu0 0.0
    %1115 = vmatprep.subr.mxu0 0.0
    %1116 = vmatpush1.msra.mxu0 0.0
    %1117 = vmatprep.subr.mxu0 0.0
    %1118 = vmatpush1.msra.mxu0 0.0
    %1119 = vmatprep.subr.mxu0 0.0
    %1120 = vmatpush1.msra.mxu0 0.0
    %1121 = vmatprep.subr.mxu0 0.0
    %1122 = vmatpush1.msra.mxu0 0.0
    %1123 = vmatprep.subr.mxu0 0.0
    %1124 = vmatpush1.msra.mxu0 0.0
    %1125 = vmatprep.subr.mxu0 0.0
    %1126 = vmatpush1.msra.mxu0 0.0
    %1127 = vmatprep.subr.mxu0 0.0
    %1128 = vmatpush1.msra.mxu0 0.0
    %1129 = vmatprep.subr.mxu0 0.0
    %1130 = vmatpush1.msra.mxu0 0.0
    %1131 = vmatprep.subr.mxu0 0.0
    %1132 = vmatpush1.msra.mxu0 0.0
    %1133 = vmatprep.subr.mxu0 0.0
    %1134 = vmatpush1.msra.mxu0 0.0
    %1135 = vmatprep.subr.mxu0 0.0
    %1136 = vmatpush1.msra.mxu0 0.0
    %1137 = vmatprep.subr.mxu0 0.0
    %1138 = vmatpush1.msra.mxu0 0.0
    %1139 = vmatprep.subr.mxu0 0.0
    %1140 = vmatpush1.msra.mxu0 0.0
    %1141 = vmatprep.subr.mxu0 0.0
    %1142 = vmatpush1.msra.mxu0 0.0
    %1143 = vmatprep.subr.mxu0 0.0
    %1144 = vmatpush1.msra.mxu0 0.0
    %1145 = vmatprep.mubr.f32.mxu0 0.0
    %1146 = vmatmul.mubr.f32.gmra.mrb[0].mxu0 %v972
    %v1147 = vpop.f32.mrb[0].mxu0
    %v1148 = vadd.f32 0.0, %v1147
    %v1149 = vpop.f32.mrb[0].mxu0
    %v1150 = vadd.f32 0.0, %v1149
    %1151 = vmatprep.mubr.f32.mxu0 0.0
    %1152 = vmatmul.mubr.f32.gmra.mrb[0].mxu0 %v975
    %v1153 = vpop.f32.mrb[0].mxu0
    %v1154 = vadd.f32 0.0, %v1153
    %v1155 = vpop.f32.mrb[0].mxu0
    %v1156 = vadd.f32 0.0, %v1155
    %1157 = vmatprep.mubr.f32.mxu0 0.0
    %1158 = vmatmul.mubr.f32.gmra.mrb[0].mxu0 %v978
    %v1159 = vpop.f32.mrb[0].mxu0
    %v1160 = vadd.f32 0.0, %v1159
    %v1161 = vpop.f32.mrb[0].mxu0
    %v1162 = vadd.f32 0.0, %v1161
    %1163 = vmatprep.mubr.f32.mxu0 0.0
    %1164 = vmatmul.mubr.f32.gmra.mrb[0].mxu0 %v981
    %v1165 = vpop.f32.mrb[0].mxu0
    %v1166 = vadd.f32 0.0, %v1165
    %v1167 = vpop.f32.mrb[0].mxu0
    %v1168 = vadd.f32 0.0, %v1167
    %1169 = vmatprep.mubr.f32.mxu0 0.0
    %1170 = vmatmul.mubr.f32.gmra.mrb[0].mxu0 %v984
    %v1171 = vpop.f32.mrb[0].mxu0
    %v1172 = vadd.f32 0.0, %v1171
    %v1173 = vpop.f32.mrb[0].mxu0
    %v1174 = vadd.f32 0.0, %v1173
    %1175 = vdwg.mxu0
    %v1176 = vld [vmem:[%s4] sm:$0xff]
    %v1177 = vld [vmem:[%s4 + $0x8] sm:$0xff]
    %v1178 = vld [vmem:[%s4 + $0x10] sm:$0xff]
    %v1179 = vld [vmem:[%s4 + $0x18] sm:$0xff]
    %v1180 = vld [vmem:[%s4 + $0x20] sm:$0xff]
    %vm1181 = vcmask 39936
    %v1183 = vsel %vm1181, %v1176, 0
    %v1186 = vsel %vm1181, %v1177, 0
    %v1189 = vsel %vm1181, %v1178, 0
    %v1192 = vsel %vm1181, %v1179, 0
    %v1195 = vsel %vm1181, %v1180, 0
    %v1198 = vsel %vm478, %v603, 0
    %v1201 = vsel %vm478, %v604, 0
    %v1204 = vsel %vm478, %v605, 0
    %v1207 = vsel %vm478, %v606, 0
    %1209 = vmatprep.subr.mxu0 %v1201
    %1210 = vmatpush1.msra.mxu0 %v1198
    %1211 = vmatprep.subr.mxu0 0.0
    %1212 = vmatpush1.msra.mxu0 0.0
    %1213 = vmatprep.subr.mxu0 0.0
    %1214 = vmatpush1.msra.mxu0 0.0
    %1215 = vmatprep.subr.mxu0 0.0
    %1216 = vmatpush1.msra.mxu0 0.0
    %1217 = vmatprep.subr.mxu0 0.0
    %1218 = vmatpush1.msra.mxu0 0.0
    %1219 = vmatprep.subr.mxu0 0.0
    %1220 = vmatpush1.msra.mxu0 0.0
    %1221 = vmatprep.subr.mxu0 0.0
    %1222 = vmatpush1.msra.mxu0 0.0
    %1223 = vmatprep.subr.mxu0 0.0
    %1224 = vmatpush1.msra.mxu0 0.0
    %1225 = vmatprep.subr.mxu0 0.0
    %1226 = vmatpush1.msra.mxu0 0.0
    %1227 = vmatprep.subr.mxu0 0.0
    %1228 = vmatpush1.msra.mxu0 0.0
    %1229 = vmatprep.subr.mxu0 0.0
    %1230 = vmatpush1.msra.mxu0 0.0
    %1231 = vmatprep.subr.mxu0 0.0
    %1232 = vmatpush1.msra.mxu0 0.0
    %1233 = vmatprep.subr.mxu0 0.0
    %1234 = vmatpush1.msra.mxu0 0.0
    %1235 = vmatprep.subr.mxu0 0.0
    %1236 = vmatpush1.msra.mxu0 0.0
    %1237 = vmatprep.subr.mxu0 0.0
    %1238 = vmatpush1.msra.mxu0 0.0
    %1239 = vmatprep.subr.mxu0 0.0
    %1240 = vmatpush1.msra.mxu0 0.0
    %1241 = vmatprep.subr.mxu0 0.0
    %1242 = vmatpush1.msra.mxu0 0.0
    %1243 = vmatprep.subr.mxu0 0.0
    %1244 = vmatpush1.msra.mxu0 0.0
    %1245 = vmatprep.subr.mxu0 0.0
    %1246 = vmatpush1.msra.mxu0 0.0
    %1247 = vmatprep.subr.mxu0 0.0
    %1248 = vmatpush1.msra.mxu0 0.0
    %1249 = vmatprep.subr.mxu0 0.0
    %1250 = vmatpush1.msra.mxu0 0.0
    %1251 = vmatprep.subr.mxu0 0.0
    %1252 = vmatpush1.msra.mxu0 0.0
    %1253 = vmatprep.subr.mxu0 0.0
    %1254 = vmatpush1.msra.mxu0 0.0
    %1255 = vmatprep.subr.mxu0 0.0
    %1256 = vmatpush1.msra.mxu0 0.0
    %1257 = vmatprep.subr.mxu0 0.0
    %1258 = vmatpush1.msra.mxu0 0.0
    %1259 = vmatprep.subr.mxu0 0.0
    %1260 = vmatpush1.msra.mxu0 0.0
    %1261 = vmatprep.subr.mxu0 0.0
    %1262 = vmatpush1.msra.mxu0 0.0
    %1263 = vmatprep.subr.mxu0 0.0
    %1264 = vmatpush1.msra.mxu0 0.0
    %1265 = vmatprep.subr.mxu0 0.0
    %1266 = vmatpush1.msra.mxu0 0.0
    %1267 = vmatprep.subr.mxu0 0.0
    %1268 = vmatpush1.msra.mxu0 0.0
    %1269 = vmatprep.subr.mxu0 0.0
    %1270 = vmatpush1.msra.mxu0 0.0
    %1271 = vmatprep.subr.mxu0 0.0
    %1272 = vmatpush1.msra.mxu0 0.0
    %1273 = vmatprep.mubr.f32.mxu0 0.0
    %1274 = vmatmul.mubr.f32.gmra.mrb[0].mxu0 %v1183
    %v1275 = vpop.f32.mrb[0].mxu0
    %v1276 = vadd.f32 0.0, %v1275
    %v1277 = vpop.f32.mrb[0].mxu0
    %v1278 = vadd.f32 0.0, %v1277
    %1279 = vmatprep.mubr.f32.mxu0 0.0
    %1280 = vmatmul.mubr.f32.gmra.mrb[0].mxu0 %v1186
    %v1281 = vpop.f32.mrb[0].mxu0
    %v1282 = vadd.f32 0.0, %v1281
    %v1283 = vpop.f32.mrb[0].mxu0
    %v1284 = vadd.f32 0.0, %v1283
    %1285 = vmatprep.mubr.f32.mxu0 0.0
    %1286 = vmatmul.mubr.f32.gmra.mrb[0].mxu0 %v1189
    %v1287 = vpop.f32.mrb[0].mxu0
    %v1288 = vadd.f32 0.0, %v1287
    %v1289 = vpop.f32.mrb[0].mxu0
    %v1290 = vadd.f32 0.0, %v1289
    %1291 = vmatprep.mubr.f32.mxu0 0.0
    %1292 = vmatmul.mubr.f32.gmra.mrb[0].mxu0 %v1192
    %v1293 = vpop.f32.mrb[0].mxu0
    %v1294 = vadd.f32 0.0, %v1293
    %v1295 = vpop.f32.mrb[0].mxu0
    %v1296 = vadd.f32 0.0, %v1295
    %1297 = vmatprep.mubr.f32.mxu0 0.0
    %1298 = vmatmul.mubr.f32.gmra.mrb[0].mxu0 %v1195
    %v1299 = vpop.f32.mrb[0].mxu0
    %v1300 = vadd.f32 0.0, %v1299
    %v1301 = vpop.f32.mrb[0].mxu0
    %v1302 = vadd.f32 0.0, %v1301
    %1303 = vdwg.mxu0
    %1304 = vmatprep.subr.mxu0 %v1207
    %1305 = vmatpush1.msra.mxu0 %v1204
    %1306 = vmatprep.subr.mxu0 0.0
    %1307 = vmatpush1.msra.mxu0 0.0
    %1308 = vmatprep.subr.mxu0 0.0
    %1309 = vmatpush1.msra.mxu0 0.0
    %1310 = vmatprep.subr.mxu0 0.0
    %1311 = vmatpush1.msra.mxu0 0.0
    %1312 = vmatprep.subr.mxu0 0.0
    %1313 = vmatpush1.msra.mxu0 0.0
    %1314 = vmatprep.subr.mxu0 0.0
    %1315 = vmatpush1.msra.mxu0 0.0
    %1316 = vmatprep.subr.mxu0 0.0
    %1317 = vmatpush1.msra.mxu0 0.0
    %1318 = vmatprep.subr.mxu0 0.0
    %1319 = vmatpush1.msra.mxu0 0.0
    %1320 = vmatprep.subr.mxu0 0.0
    %1321 = vmatpush1.msra.mxu0 0.0
    %1322 = vmatprep.subr.mxu0 0.0
    %1323 = vmatpush1.msra.mxu0 0.0
    %1324 = vmatprep.subr.mxu0 0.0
    %1325 = vmatpush1.msra.mxu0 0.0
    %1326 = vmatprep.subr.mxu0 0.0
    %1327 = vmatpush1.msra.mxu0 0.0
    %1328 = vmatprep.subr.mxu0 0.0
    %1329 = vmatpush1.msra.mxu0 0.0
    %1330 = vmatprep.subr.mxu0 0.0
    %1331 = vmatpush1.msra.mxu0 0.0
    %1332 = vmatprep.subr.mxu0 0.0
    %1333 = vmatpush1.msra.mxu0 0.0
    %1334 = vmatprep.subr.mxu0 0.0
    %1335 = vmatpush1.msra.mxu0 0.0
    %1336 = vmatprep.subr.mxu0 0.0
    %1337 = vmatpush1.msra.mxu0 0.0
    %1338 = vmatprep.subr.mxu0 0.0
    %1339 = vmatpush1.msra.mxu0 0.0
    %1340 = vmatprep.subr.mxu0 0.0
    %1341 = vmatpush1.msra.mxu0 0.0
    %1342 = vmatprep.subr.mxu0 0.0
    %1343 = vmatpush1.msra.mxu0 0.0
    %1344 = vmatprep.subr.mxu0 0.0
    %1345 = vmatpush1.msra.mxu0 0.0
    %1346 = vmatprep.subr.mxu0 0.0
    %1347 = vmatpush1.msra.mxu0 0.0
    %1348 = vmatprep.subr.mxu0 0.0
    %1349 = vmatpush1.msra.mxu0 0.0
    %1350 = vmatprep.subr.mxu0 0.0
    %1351 = vmatpush1.msra.mxu0 0.0
    %1352 = vmatprep.subr.mxu0 0.0
    %1353 = vmatpush1.msra.mxu0 0.0
    %1354 = vmatprep.subr.mxu0 0.0
    %1355 = vmatpush1.msra.mxu0 0.0
    %1356 = vmatprep.subr.mxu0 0.0
    %1357 = vmatpush1.msra.mxu0 0.0
    %1358 = vmatprep.subr.mxu0 0.0
    %1359 = vmatpush1.msra.mxu0 0.0
    %1360 = vmatprep.subr.mxu0 0.0
    %1361 = vmatpush1.msra.mxu0 0.0
    %1362 = vmatprep.subr.mxu0 0.0
    %1363 = vmatpush1.msra.mxu0 0.0
    %1364 = vmatprep.subr.mxu0 0.0
    %1365 = vmatpush1.msra.mxu0 0.0
    %1366 = vmatprep.subr.mxu0 0.0
    %1367 = vmatpush1.msra.mxu0 0.0
    %1368 = vmatprep.mubr.f32.mxu0 0.0
    %1369 = vmatmul.mubr.f32.gmra.mrb[0].mxu0 %v1183
    %v1370 = vpop.f32.mrb[0].mxu0
    %v1371 = vadd.f32 0.0, %v1370
    %v1372 = vpop.f32.mrb[0].mxu0
    %v1373 = vadd.f32 0.0, %v1372
    %1374 = vmatprep.mubr.f32.mxu0 0.0
    %1375 = vmatmul.mubr.f32.gmra.mrb[0].mxu0 %v1186
    %v1376 = vpop.f32.mrb[0].mxu0
    %v1377 = vadd.f32 0.0, %v1376
    %v1378 = vpop.f32.mrb[0].mxu0
    %v1379 = vadd.f32 0.0, %v1378
    %1380 = vmatprep.mubr.f32.mxu0 0.0
    %1381 = vmatmul.mubr.f32.gmra.mrb[0].mxu0 %v1189
    %v1382 = vpop.f32.mrb[0].mxu0
    %v1383 = vadd.f32 0.0, %v1382
    %v1384 = vpop.f32.mrb[0].mxu0
    %v1385 = vadd.f32 0.0, %v1384
    %1386 = vmatprep.mubr.f32.mxu0 0.0
    %1387 = vmatmul.mubr.f32.gmra.mrb[0].mxu0 %v1192
    %v1388 = vpop.f32.mrb[0].mxu0
    %v1389 = vadd.f32 0.0, %v1388
    %v1390 = vpop.f32.mrb[0].mxu0
    %v1391 = vadd.f32 0.0, %v1390
    %1392 = vmatprep.mubr.f32.mxu0 0.0
    %1393 = vmatmul.mubr.f32.gmra.mrb[0].mxu0 %v1195
    %v1394 = vpop.f32.mrb[0].mxu0
    %v1395 = vadd.f32 0.0, %v1394
    %v1396 = vpop.f32.mrb[0].mxu0
    %v1397 = vadd.f32 0.0, %v1396
    %1398 = vdwg.mxu0
    %v1399 = vmul.f32 %v1053, %v1276
    %v1400 = vmul.f32 %v1055, %v1278
    %v1401 = vmul.f32 %v1148, %v1371
    %v1402 = vmul.f32 %v1150, %v1373
    %v1403 = vmul.f32 %v1059, %v1282
    %v1404 = vmul.f32 %v1061, %v1284
    %v1405 = vmul.f32 %v1154, %v1377
    %v1406 = vmul.f32 %v1156, %v1379
    %v1407 = vmul.f32 %v1065, %v1288
    %v1408 = vmul.f32 %v1067, %v1290
    %v1409 = vmul.f32 %v1160, %v1383
    %v1410 = vmul.f32 %v1162, %v1385
    %v1411 = vmul.f32 %v1071, %v1294
    %v1412 = vmul.f32 %v1073, %v1296
    %v1413 = vmul.f32 %v1166, %v1389
    %v1414 = vmul.f32 %v1168, %v1391
    %v1415 = vmul.f32 %v1077, %v1300
    %v1416 = vmul.f32 %v1079, %v1302
    %v1417 = vmul.f32 %v1172, %v1395
    %v1418 = vmul.f32 %v1174, %v1397
    %v1419 = vld [vmem:[%s5] sm:$0xff]
    %v1420 = vld [vmem:[%s5 + $0x8] sm:$0xff]
    %v1421 = vld [vmem:[%s5 + $0x10] sm:$0xff]
    %v1422 = vld [vmem:[%s5 + $0x18] sm:$0x1]
    %v1424 = vsel %vm1181, %v1419, 0
    %v1427 = vsel %vm1181, %v1420, 0
    %v1430 = vsel %vm1181, %v1421, 0
    %v1433 = vsel %vm1181, %v1422, 0
    %v1436 = vsel %vm478, %v776, 0
    %v1439 = vsel %vm478, %v777, 0
    %v1442 = vsel %vm478, %v778, 0
    %v1445 = vsel %vm478, %v779, 0
    %1447 = vmatprep.subr.mxu0 %v1439
    %1448 = vmatpush1.msra.mxu0 %v1436
    %1449 = vmatprep.subr.mxu0 0.0
    %1450 = vmatpush1.msra.mxu0 0.0
    %1451 = vmatprep.subr.mxu0 0.0
    %1452 = vmatpush1.msra.mxu0 0.0
    %1453 = vmatprep.subr.mxu0 0.0
    %1454 = vmatpush1.msra.mxu0 0.0
    %1455 = vmatprep.subr.mxu0 0.0
    %1456 = vmatpush1.msra.mxu0 0.0
    %1457 = vmatprep.subr.mxu0 0.0
    %1458 = vmatpush1.msra.mxu0 0.0
    %1459 = vmatprep.subr.mxu0 0.0
    %1460 = vmatpush1.msra.mxu0 0.0
    %1461 = vmatprep.subr.mxu0 0.0
    %1462 = vmatpush1.msra.mxu0 0.0
    %1463 = vmatprep.subr.mxu0 0.0
    %1464 = vmatpush1.msra.mxu0 0.0
    %1465 = vmatprep.subr.mxu0 0.0
    %1466 = vmatpush1.msra.mxu0 0.0
    %1467 = vmatprep.subr.mxu0 0.0
    %1468 = vmatpush1.msra.mxu0 0.0
    %1469 = vmatprep.subr.mxu0 0.0
    %1470 = vmatpush1.msra.mxu0 0.0
    %1471 = vmatprep.subr.mxu0 0.0
    %1472 = vmatpush1.msra.mxu0 0.0
    %1473 = vmatprep.subr.mxu0 0.0
    %1474 = vmatpush1.msra.mxu0 0.0
    %1475 = vmatprep.subr.mxu0 0.0
    %1476 = vmatpush1.msra.mxu0 0.0
    %1477 = vmatprep.subr.mxu0 0.0
    %1478 = vmatpush1.msra.mxu0 0.0
    %1479 = vmatprep.subr.mxu0 0.0
    %1480 = vmatpush1.msra.mxu0 0.0
    %1481 = vmatprep.subr.mxu0 0.0
    %1482 = vmatpush1.msra.mxu0 0.0
    %1483 = vmatprep.subr.mxu0 0.0
    %1484 = vmatpush1.msra.mxu0 0.0
    %1485 = vmatprep.subr.mxu0 0.0
    %1486 = vmatpush1.msra.mxu0 0.0
    %1487 = vmatprep.subr.mxu0 0.0
    %1488 = vmatpush1.msra.mxu0 0.0
    %1489 = vmatprep.subr.mxu0 0.0
    %1490 = vmatpush1.msra.mxu0 0.0
    %1491 = vmatprep.subr.mxu0 0.0
    %1492 = vmatpush1.msra.mxu0 0.0
    %1493 = vmatprep.subr.mxu0 0.0
    %1494 = vmatpush1.msra.mxu0 0.0
    %1495 = vmatprep.subr.mxu0 0.0
    %1496 = vmatpush1.msra.mxu0 0.0
    %1497 = vmatprep.subr.mxu0 0.0
    %1498 = vmatpush1.msra.mxu0 0.0
    %1499 = vmatprep.subr.mxu0 0.0
    %1500 = vmatpush1.msra.mxu0 0.0
    %1501 = vmatprep.subr.mxu0 0.0
    %1502 = vmatpush1.msra.mxu0 0.0
    %1503 = vmatprep.subr.mxu0 0.0
    %1504 = vmatpush1.msra.mxu0 0.0
    %1505 = vmatprep.subr.mxu0 0.0
    %1506 = vmatpush1.msra.mxu0 0.0
    %1507 = vmatprep.subr.mxu0 0.0
    %1508 = vmatpush1.msra.mxu0 0.0
    %1509 = vmatprep.subr.mxu0 0.0
    %1510 = vmatpush1.msra.mxu0 0.0
    %1511 = vmatprep.mubr.f32.mxu0 0.0
    %1512 = vmatmul.mubr.f32.gmra.mrb[0].mxu0 %v1424
    %v1513 = vpop.f32.mrb[0].mxu0
    %v1514 = vadd.f32 0.0, %v1513
    %v1515 = vpop.f32.mrb[0].mxu0
    %v1516 = vadd.f32 0.0, %v1515
    %1517 = vmatprep.mubr.f32.mxu0 0.0
    %1518 = vmatmul.mubr.f32.gmra.mrb[0].mxu0 %v1427
    %v1519 = vpop.f32.mrb[0].mxu0
    %v1520 = vadd.f32 0.0, %v1519
    %v1521 = vpop.f32.mrb[0].mxu0
    %v1522 = vadd.f32 0.0, %v1521
    %1523 = vmatprep.mubr.f32.mxu0 0.0
    %1524 = vmatmul.mubr.f32.gmra.mrb[0].mxu0 %v1430
    %v1525 = vpop.f32.mrb[0].mxu0
    %v1526 = vadd.f32 0.0, %v1525
    %v1527 = vpop.f32.mrb[0].mxu0
    %v1528 = vadd.f32 0.0, %v1527
    %1529 = vmatprep.mubr.f32.mxu0 0.0
    %1530 = vmatmul.mubr.f32.gmra.mrb[0].mxu0 %v1433
    %v1531 = vpop.f32.mrb[0].mxu0
    %v1532 = vadd.f32 0.0, %v1531
    %v1533 = vpop.f32.mrb[0].mxu0
    %v1534 = vadd.f32 0.0, %v1533
    %1535 = vdwg.mxu0
    %1536 = vmatprep.subr.mxu0 %v1445
    %1537 = vmatpush1.msra.mxu0 %v1442
    %1538 = vmatprep.subr.mxu0 0.0
    %1539 = vmatpush1.msra.mxu0 0.0
    %1540 = vmatprep.subr.mxu0 0.0
    %1541 = vmatpush1.msra.mxu0 0.0
    %1542 = vmatprep.subr.mxu0 0.0
    %1543 = vmatpush1.msra.mxu0 0.0
    %1544 = vmatprep.subr.mxu0 0.0
    %1545 = vmatpush1.msra.mxu0 0.0
    %1546 = vmatprep.subr.mxu0 0.0
    %1547 = vmatpush1.msra.mxu0 0.0
    %1548 = vmatprep.subr.mxu0 0.0
    %1549 = vmatpush1.msra.mxu0 0.0
    %1550 = vmatprep.subr.mxu0 0.0
    %1551 = vmatpush1.msra.mxu0 0.0
    %1552 = vmatprep.subr.mxu0 0.0
    %1553 = vmatpush1.msra.mxu0 0.0
    %1554 = vmatprep.subr.mxu0 0.0
    %1555 = vmatpush1.msra.mxu0 0.0
    %1556 = vmatprep.subr.mxu0 0.0
    %1557 = vmatpush1.msra.mxu0 0.0
    %1558 = vmatprep.subr.mxu0 0.0
    %1559 = vmatpush1.msra.mxu0 0.0
    %1560 = vmatprep.subr.mxu0 0.0
    %1561 = vmatpush1.msra.mxu0 0.0
    %1562 = vmatprep.subr.mxu0 0.0
    %1563 = vmatpush1.msra.mxu0 0.0
    %1564 = vmatprep.subr.mxu0 0.0
    %1565 = vmatpush1.msra.mxu0 0.0
    %1566 = vmatprep.subr.mxu0 0.0
    %1567 = vmatpush1.msra.mxu0 0.0
    %1568 = vmatprep.subr.mxu0 0.0
    %1569 = vmatpush1.msra.mxu0 0.0
    %1570 = vmatprep.subr.mxu0 0.0
    %1571 = vmatpush1.msra.mxu0 0.0
    %1572 = vmatprep.subr.mxu0 0.0
    %1573 = vmatpush1.msra.mxu0 0.0
    %1574 = vmatprep.subr.mxu0 0.0
    %1575 = vmatpush1.msra.mxu0 0.0
    %1576 = vmatprep.subr.mxu0 0.0
    %1577 = vmatpush1.msra.mxu0 0.0
    %1578 = vmatprep.subr.mxu0 0.0
    %1579 = vmatpush1.msra.mxu0 0.0
    %1580 = vmatprep.subr.mxu0 0.0
    %1581 = vmatpush1.msra.mxu0 0.0
    %1582 = vmatprep.subr.mxu0 0.0
    %1583 = vmatpush1.msra.mxu0 0.0
    %1584 = vmatprep.subr.mxu0 0.0
    %1585 = vmatpush1.msra.mxu0 0.0
    %1586 = vmatprep.subr.mxu0 0.0
    %1587 = vmatpush1.msra.mxu0 0.0
    %1588 = vmatprep.subr.mxu0 0.0
    %1589 = vmatpush1.msra.mxu0 0.0
    %1590 = vmatprep.subr.mxu0 0.0
    %1591 = vmatpush1.msra.mxu0 0.0
    %1592 = vmatprep.subr.mxu0 0.0
    %1593 = vmatpush1.msra.mxu0 0.0
    %1594 = vmatprep.subr.mxu0 0.0
    %1595 = vmatpush1.msra.mxu0 0.0
    %1596 = vmatprep.subr.mxu0 0.0
    %1597 = vmatpush1.msra.mxu0 0.0
    %1598 = vmatprep.subr.mxu0 0.0
    %1599 = vmatpush1.msra.mxu0 0.0
    %1600 = vmatprep.mubr.f32.mxu0 0.0
    %1601 = vmatmul.mubr.f32.gmra.mrb[0].mxu0 %v1424
    %v1602 = vpop.f32.mrb[0].mxu0
    %v1603 = vadd.f32 0.0, %v1602
    %v1604 = vpop.f32.mrb[0].mxu0
    %v1605 = vadd.f32 0.0, %v1604
    %1606 = vmatprep.mubr.f32.mxu0 0.0
    %1607 = vmatmul.mubr.f32.gmra.mrb[0].mxu0 %v1427
    %v1608 = vpop.f32.mrb[0].mxu0
    %v1609 = vadd.f32 0.0, %v1608
    %v1610 = vpop.f32.mrb[0].mxu0
    %v1611 = vadd.f32 0.0, %v1610
    %1612 = vmatprep.mubr.f32.mxu0 0.0
    %1613 = vmatmul.mubr.f32.gmra.mrb[0].mxu0 %v1430
    %v1614 = vpop.f32.mrb[0].mxu0
    %v1615 = vadd.f32 0.0, %v1614
    %v1616 = vpop.f32.mrb[0].mxu0
    %v1617 = vadd.f32 0.0, %v1616
    %1618 = vmatprep.mubr.f32.mxu0 0.0
    %1619 = vmatmul.mubr.f32.gmra.mrb[0].mxu0 %v1433
    %v1620 = vpop.f32.mrb[0].mxu0
    %v1621 = vadd.f32 0.0, %v1620
    %v1622 = vpop.f32.mrb[0].mxu0
    %v1623 = vadd.f32 0.0, %v1622
    %1624 = vdwg.mxu0
    %v1625 = vld [vmem:[%s6] sm:$0xff]
    %v1626 = vld [vmem:[%s6 + $0x8] sm:$0xff]
    %v1627 = vld [vmem:[%s6 + $0x10] sm:$0xff]
    %v1628 = vld [vmem:[%s6 + $0x18] sm:$0x1]
    %v1630 = vsel %vm1181, %v1625, 0
    %v1633 = vsel %vm1181, %v1626, 0
    %v1636 = vsel %vm1181, %v1627, 0
    %v1639 = vsel %vm1181, %v1628, 0
    %v1642 = vsel %vm478, %v949, 0
    %v1645 = vsel %vm478, %v950, 0
    %v1648 = vsel %vm478, %v951, 0
    %v1651 = vsel %vm478, %v952, 0
    %1653 = vmatprep.subr.mxu0 %v1645
    %1654 = vmatpush1.msra.mxu0 %v1642
    %1655 = vmatprep.subr.mxu0 0.0
    %1656 = vmatpush1.msra.mxu0 0.0
    %1657 = vmatprep.subr.mxu0 0.0
    %1658 = vmatpush1.msra.mxu0 0.0
    %1659 = vmatprep.subr.mxu0 0.0
    %1660 = vmatpush1.msra.mxu0 0.0
    %1661 = vmatprep.subr.mxu0 0.0
    %1662 = vmatpush1.msra.mxu0 0.0
    %1663 = vmatprep.subr.mxu0 0.0
    %1664 = vmatpush1.msra.mxu0 0.0
    %1665 = vmatprep.subr.mxu0 0.0
    %1666 = vmatpush1.msra.mxu0 0.0
    %1667 = vmatprep.subr.mxu0 0.0
    %1668 = vmatpush1.msra.mxu0 0.0
    %1669 = vmatprep.subr.mxu0 0.0
    %1670 = vmatpush1.msra.mxu0 0.0
    %1671 = vmatprep.subr.mxu0 0.0
    %1672 = vmatpush1.msra.mxu0 0.0
    %1673 = vmatprep.subr.mxu0 0.0
    %1674 = vmatpush1.msra.mxu0 0.0
    %1675 = vmatprep.subr.mxu0 0.0
    %1676 = vmatpush1.msra.mxu0 0.0
    %1677 = vmatprep.subr.mxu0 0.0
    %1678 = vmatpush1.msra.mxu0 0.0
    %1679 = vmatprep.subr.mxu0 0.0
    %1680 = vmatpush1.msra.mxu0 0.0
    %1681 = vmatprep.subr.mxu0 0.0
    %1682 = vmatpush1.msra.mxu0 0.0
    %1683 = vmatprep.subr.mxu0 0.0
    %1684 = vmatpush1.msra.mxu0 0.0
    %1685 = vmatprep.subr.mxu0 0.0
    %1686 = vmatpush1.msra.mxu0 0.0
    %1687 = vmatprep.subr.mxu0 0.0
    %1688 = vmatpush1.msra.mxu0 0.0
    %1689 = vmatprep.subr.mxu0 0.0
    %1690 = vmatpush1.msra.mxu0 0.0
    %1691 = vmatprep.subr.mxu0 0.0
    %1692 = vmatpush1.msra.mxu0 0.0
    %1693 = vmatprep.subr.mxu0 0.0
    %1694 = vmatpush1.msra.mxu0 0.0
    %1695 = vmatprep.subr.mxu0 0.0
    %1696 = vmatpush1.msra.mxu0 0.0
    %1697 = vmatprep.subr.mxu0 0.0
    %1698 = vmatpush1.msra.mxu0 0.0
    %1699 = vmatprep.subr.mxu0 0.0
    %1700 = vmatpush1.msra.mxu0 0.0
    %1701 = vmatprep.subr.mxu0 0.0
    %1702 = vmatpush1.msra.mxu0 0.0
    %1703 = vmatprep.subr.mxu0 0.0
    %1704 = vmatpush1.msra.mxu0 0.0
    %1705 = vmatprep.subr.mxu0 0.0
    %1706 = vmatpush1.msra.mxu0 0.0
    %1707 = vmatprep.subr.mxu0 0.0
    %1708 = vmatpush1.msra.mxu0 0.0
    %1709 = vmatprep.subr.mxu0 0.0
    %1710 = vmatpush1.msra.mxu0 0.0
    %1711 = vmatprep.subr.mxu0 0.0
    %1712 = vmatpush1.msra.mxu0 0.0
    %1713 = vmatprep.subr.mxu0 0.0
    %1714 = vmatpush1.msra.mxu0 0.0
    %1715 = vmatprep.subr.mxu0 0.0
    %1716 = vmatpush1.msra.mxu0 0.0
    %1717 = vmatprep.mubr.f32.mxu0 0.0
    %1718 = vmatmul.mubr.f32.gmra.mrb[0].mxu0 %v1630
    %v1719 = vpop.f32.mrb[0].mxu0
    %v1720 = vadd.f32 0.0, %v1719
    %v1721 = vpop.f32.mrb[0].mxu0
    %v1722 = vadd.f32 0.0, %v1721
    %1723 = vmatprep.mubr.f32.mxu0 0.0
    %1724 = vmatmul.mubr.f32.gmra.mrb[0].mxu0 %v1633
    %v1725 = vpop.f32.mrb[0].mxu0
    %v1726 = vadd.f32 0.0, %v1725
    %v1727 = vpop.f32.mrb[0].mxu0
    %v1728 = vadd.f32 0.0, %v1727
    %1729 = vmatprep.mubr.f32.mxu0 0.0
    %1730 = vmatmul.mubr.f32.gmra.mrb[0].mxu0 %v1636
    %v1731 = vpop.f32.mrb[0].mxu0
    %v1732 = vadd.f32 0.0, %v1731
    %v1733 = vpop.f32.mrb[0].mxu0
    %v1734 = vadd.f32 0.0, %v1733
    %1735 = vmatprep.mubr.f32.mxu0 0.0
    %1736 = vmatmul.mubr.f32.gmra.mrb[0].mxu0 %v1639
    %v1737 = vpop.f32.mrb[0].mxu0
    %v1738 = vadd.f32 0.0, %v1737
    %v1739 = vpop.f32.mrb[0].mxu0
    %v1740 = vadd.f32 0.0, %v1739
    %1741 = vdwg.mxu0
    %1742 = vmatprep.subr.mxu0 %v1651
    %1743 = vmatpush1.msra.mxu0 %v1648
    %1744 = vmatprep.subr.mxu0 0.0
    %1745 = vmatpush1.msra.mxu0 0.0
    %1746 = vmatprep.subr.mxu0 0.0
    %1747 = vmatpush1.msra.mxu0 0.0
    %1748 = vmatprep.subr.mxu0 0.0
    %1749 = vmatpush1.msra.mxu0 0.0
    %1750 = vmatprep.subr.mxu0 0.0
    %1751 = vmatpush1.msra.mxu0 0.0
    %1752 = vmatprep.subr.mxu0 0.0
    %1753 = vmatpush1.msra.mxu0 0.0
    %1754 = vmatprep.subr.mxu0 0.0
    %1755 = vmatpush1.msra.mxu0 0.0
    %1756 = vmatprep.subr.mxu0 0.0
    %1757 = vmatpush1.msra.mxu0 0.0
    %1758 = vmatprep.subr.mxu0 0.0
    %1759 = vmatpush1.msra.mxu0 0.0
    %1760 = vmatprep.subr.mxu0 0.0
    %1761 = vmatpush1.msra.mxu0 0.0
    %1762 = vmatprep.subr.mxu0 0.0
    %1763 = vmatpush1.msra.mxu0 0.0
    %1764 = vmatprep.subr.mxu0 0.0
    %1765 = vmatpush1.msra.mxu0 0.0
    %1766 = vmatprep.subr.mxu0 0.0
    %1767 = vmatpush1.msra.mxu0 0.0
    %1768 = vmatprep.subr.mxu0 0.0
    %1769 = vmatpush1.msra.mxu0 0.0
    %1770 = vmatprep.subr.mxu0 0.0
    %1771 = vmatpush1.msra.mxu0 0.0
    %1772 = vmatprep.subr.mxu0 0.0
    %1773 = vmatpush1.msra.mxu0 0.0
    %1774 = vmatprep.subr.mxu0 0.0
    %1775 = vmatpush1.msra.mxu0 0.0
    %1776 = vmatprep.subr.mxu0 0.0
    %1777 = vmatpush1.msra.mxu0 0.0
    %1778 = vmatprep.subr.mxu0 0.0
    %1779 = vmatpush1.msra.mxu0 0.0
    %1780 = vmatprep.subr.mxu0 0.0
    %1781 = vmatpush1.msra.mxu0 0.0
    %1782 = vmatprep.subr.mxu0 0.0
    %1783 = vmatpush1.msra.mxu0 0.0
    %1784 = vmatprep.subr.mxu0 0.0
    %1785 = vmatpush1.msra.mxu0 0.0
    %1786 = vmatprep.subr.mxu0 0.0
    %1787 = vmatpush1.msra.mxu0 0.0
    %1788 = vmatprep.subr.mxu0 0.0
    %1789 = vmatpush1.msra.mxu0 0.0
    %1790 = vmatprep.subr.mxu0 0.0
    %1791 = vmatpush1.msra.mxu0 0.0
    %1792 = vmatprep.subr.mxu0 0.0
    %1793 = vmatpush1.msra.mxu0 0.0
    %1794 = vmatprep.subr.mxu0 0.0
    %1795 = vmatpush1.msra.mxu0 0.0
    %1796 = vmatprep.subr.mxu0 0.0
    %1797 = vmatpush1.msra.mxu0 0.0
    %1798 = vmatprep.subr.mxu0 0.0
    %1799 = vmatpush1.msra.mxu0 0.0
    %1800 = vmatprep.subr.mxu0 0.0
    %1801 = vmatpush1.msra.mxu0 0.0
    %1802 = vmatprep.subr.mxu0 0.0
    %1803 = vmatpush1.msra.mxu0 0.0
    %1804 = vmatprep.subr.mxu0 0.0
    %1805 = vmatpush1.msra.mxu0 0.0
    %1806 = vmatprep.mubr.f32.mxu0 0.0
    %1807 = vmatmul.mubr.f32.gmra.mrb[0].mxu0 %v1630
    %v1808 = vpop.f32.mrb[0].mxu0
    %v1809 = vadd.f32 0.0, %v1808
    %v1810 = vpop.f32.mrb[0].mxu0
    %v1811 = vadd.f32 0.0, %v1810
    %1812 = vmatprep.mubr.f32.mxu0 0.0
    %1813 = vmatmul.mubr.f32.gmra.mrb[0].mxu0 %v1633
    %v1814 = vpop.f32.mrb[0].mxu0
    %v1815 = vadd.f32 0.0, %v1814
    %v1816 = vpop.f32.mrb[0].mxu0
    %v1817 = vadd.f32 0.0, %v1816
    %1818 = vmatprep.mubr.f32.mxu0 0.0
    %1819 = vmatmul.mubr.f32.gmra.mrb[0].mxu0 %v1636
    %v1820 = vpop.f32.mrb[0].mxu0
    %v1821 = vadd.f32 0.0, %v1820
    %v1822 = vpop.f32.mrb[0].mxu0
    %v1823 = vadd.f32 0.0, %v1822
    %1824 = vmatprep.mubr.f32.mxu0 0.0
    %1825 = vmatmul.mubr.f32.gmra.mrb[0].mxu0 %v1639
    %v1826 = vpop.f32.mrb[0].mxu0
    %v1827 = vadd.f32 0.0, %v1826
    %v1828 = vpop.f32.mrb[0].mxu0
    %v1829 = vadd.f32 0.0, %v1828
    %1830 = vdwg.mxu0
    %v1831 = vmul.f32 %v1514, %v1720
    %v1832 = vmul.f32 %v1516, %v1722
    %v1833 = vmul.f32 %v1603, %v1809
    %v1834 = vmul.f32 %v1605, %v1811
    %v1835 = vmul.f32 %v1520, %v1726
    %v1836 = vmul.f32 %v1522, %v1728
    %v1837 = vmul.f32 %v1609, %v1815
    %v1838 = vmul.f32 %v1611, %v1817
    %v1839 = vmul.f32 %v1526, %v1732
    %v1840 = vmul.f32 %v1528, %v1734
    %v1841 = vmul.f32 %v1615, %v1821
    %v1842 = vmul.f32 %v1617, %v1823
    %v1843 = vmul.f32 %v1532, %v1738
    %v1844 = vmul.f32 %v1534, %v1740
    %v1845 = vmul.f32 %v1621, %v1827
    %v1846 = vmul.f32 %v1623, %v1829
    %1847 = vmatprep.subr.mxu0 %v1400
    %1848 = vmatpush1.xpose.msra.mxu0 %v1399
    %1849 = vmatprep.subr.mxu0 %v1404
    %1850 = vmatpush1.xpose.msra.mxu0 %v1403
    %1851 = vmatprep.subr.mxu0 %v1408
    %1852 = vmatpush1.xpose.msra.mxu0 %v1407
    %1853 = vmatprep.subr.mxu0 %v1412
    %1854 = vmatpush1.xpose.msra.mxu0 %v1411
    %1855 = vmatprep.subr.mxu0 %v1416
    %1856 = vmatpush1.xpose.msra.mxu0 %v1415
    %1857 = vmatprep.subr.mxu0 0.0
    %1858 = vmatpush1.xpose.msra.mxu0 0.0
    %1859 = vmatprep.subr.mxu0 0.0
    %1860 = vmatpush1.xpose.msra.mxu0 0.0
    %1861 = vmatprep.subr.mxu0 0.0
    %1862 = vmatpush1.xpose.msra.mxu0 0.0
    %1863 = vmatprep.subr.mxu0 0.0
    %1864 = vmatpush1.xpose.msra.mxu0 0.0
    %1865 = vmatprep.subr.mxu0 0.0
    %1866 = vmatpush1.xpose.msra.mxu0 0.0
    %1867 = vmatprep.subr.mxu0 0.0
    %1868 = vmatpush1.xpose.msra.mxu0 0.0
    %1869 = vmatprep.subr.mxu0 0.0
    %1870 = vmatpush1.xpose.msra.mxu0 0.0
    %1871 = vmatprep.subr.mxu0 0.0
    %1872 = vmatpush1.xpose.msra.mxu0 0.0
    %1873 = vmatprep.subr.mxu0 0.0
    %1874 = vmatpush1.xpose.msra.mxu0 0.0
    %1875 = vmatprep.subr.mxu0 0.0
    %1876 = vmatpush1.xpose.msra.mxu0 0.0
    %1877 = vmatprep.subr.mxu0 0.0
    %1878 = vmatpush1.xpose.msra.mxu0 0.0
    %1879 = vmatprep.subr.mxu0 0.0
    %1880 = vmatpush1.xpose.msra.mxu0 0.0
    %1881 = vmatprep.subr.mxu0 0.0
    %1882 = vmatpush1.xpose.msra.mxu0 0.0
    %1883 = vmatprep.subr.mxu0 0.0
    %1884 = vmatpush1.xpose.msra.mxu0 0.0
    %1885 = vmatprep.subr.mxu0 0.0
    %1886 = vmatpush1.xpose.msra.mxu0 0.0
    %1887 = vmatprep.subr.mxu0 0.0
    %1888 = vmatpush1.xpose.msra.mxu0 0.0
    %1889 = vmatprep.subr.mxu0 0.0
    %1890 = vmatpush1.xpose.msra.mxu0 0.0
    %1891 = vmatprep.subr.mxu0 0.0
    %1892 = vmatpush1.xpose.msra.mxu0 0.0
    %1893 = vmatprep.subr.mxu0 0.0
    %1894 = vmatpush1.xpose.msra.mxu0 0.0
    %1895 = vmatprep.subr.mxu0 0.0
    %1896 = vmatpush1.xpose.msra.mxu0 0.0
    %1897 = vmatprep.subr.mxu0 0.0
    %1898 = vmatpush1.xpose.msra.mxu0 0.0
    %1899 = vmatprep.subr.mxu0 0.0
    %1900 = vmatpush1.xpose.msra.mxu0 0.0
    %1901 = vmatprep.subr.mxu0 0.0
    %1902 = vmatpush1.xpose.msra.mxu0 0.0
    %1903 = vmatprep.subr.mxu0 0.0
    %1904 = vmatpush1.xpose.msra.mxu0 0.0
    %1905 = vmatprep.subr.mxu0 0.0
    %1906 = vmatpush1.xpose.msra.mxu0 0.0
    %1907 = vmatprep.subr.mxu0 0.0
    %1908 = vmatpush1.xpose.msra.mxu0 0.0
    %1909 = vmatprep.subr.mxu0 0.0
    %1910 = vmatpush1.xpose.msra.mxu0 0.0
    %1911 = vmatprep.mubr.f32.mxu0 %v1832
    %1912 = vmatmul.mubr.f32.gmra.mrb[0].mxu0 %v1831
    %v1913 = vpop.f32.mrb[0].mxu0
    %v1914 = vadd.f32 0.0, %v1913
    %v1915 = vpop.f32.mrb[0].mxu0
    %1916 = vmatprep.mubr.f32.mxu0 %v1836
    %1917 = vmatmul.mubr.f32.gmra.mrb[0].mxu0 %v1835
    %v1918 = vpop.f32.mrb[0].mxu0
    %v1919 = vadd.f32 0.0, %v1918
    %v1920 = vpop.f32.mrb[0].mxu0
    %1921 = vmatprep.mubr.f32.mxu0 %v1840
    %1922 = vmatmul.mubr.f32.gmra.mrb[0].mxu0 %v1839
    %v1923 = vpop.f32.mrb[0].mxu0
    %v1924 = vadd.f32 0.0, %v1923
    %v1925 = vpop.f32.mrb[0].mxu0
    %1926 = vmatprep.mubr.f32.mxu0 %v1844
    %1927 = vmatmul.mubr.f32.gmra.mrb[0].mxu0 %v1843
    %v1928 = vpop.f32.mrb[0].mxu0
    %v1929 = vadd.f32 0.0, %v1928
    %v1930 = vpop.f32.mrb[0].mxu0
    %1931 = vdwg.mxu0
    %1932 = vmatprep.subr.mxu0 %v1402
    %1933 = vmatpush1.xpose.msra.mxu0 %v1401
    %1934 = vmatprep.subr.mxu0 %v1406
    %1935 = vmatpush1.xpose.msra.mxu0 %v1405
    %1936 = vmatprep.subr.mxu0 %v1410
    %1937 = vmatpush1.xpose.msra.mxu0 %v1409
    %1938 = vmatprep.subr.mxu0 %v1414
    %1939 = vmatpush1.xpose.msra.mxu0 %v1413
    %1940 = vmatprep.subr.mxu0 %v1418
    %1941 = vmatpush1.xpose.msra.mxu0 %v1417
    %1942 = vmatprep.subr.mxu0 0.0
    %1943 = vmatpush1.xpose.msra.mxu0 0.0
    %1944 = vmatprep.subr.mxu0 0.0
    %1945 = vmatpush1.xpose.msra.mxu0 0.0
    %1946 = vmatprep.subr.mxu0 0.0
    %1947 = vmatpush1.xpose.msra.mxu0 0.0
    %1948 = vmatprep.subr.mxu0 0.0
    %1949 = vmatpush1.xpose.msra.mxu0 0.0
    %1950 = vmatprep.subr.mxu0 0.0
    %1951 = vmatpush1.xpose.msra.mxu0 0.0
    %1952 = vmatprep.subr.mxu0 0.0
    %1953 = vmatpush1.xpose.msra.mxu0 0.0
    %1954 = vmatprep.subr.mxu0 0.0
    %1955 = vmatpush1.xpose.msra.mxu0 0.0
    %1956 = vmatprep.subr.mxu0 0.0
    %1957 = vmatpush1.xpose.msra.mxu0 0.0
    %1958 = vmatprep.subr.mxu0 0.0
    %1959 = vmatpush1.xpose.msra.mxu0 0.0
    %1960 = vmatprep.subr.mxu0 0.0
    %1961 = vmatpush1.xpose.msra.mxu0 0.0
    %1962 = vmatprep.subr.mxu0 0.0
    %1963 = vmatpush1.xpose.msra.mxu0 0.0
    %1964 = vmatprep.subr.mxu0 0.0
    %1965 = vmatpush1.xpose.msra.mxu0 0.0
    %1966 = vmatprep.subr.mxu0 0.0
    %1967 = vmatpush1.xpose.msra.mxu0 0.0
    %1968 = vmatprep.subr.mxu0 0.0
    %1969 = vmatpush1.xpose.msra.mxu0 0.0
    %1970 = vmatprep.subr.mxu0 0.0
    %1971 = vmatpush1.xpose.msra.mxu0 0.0
    %1972 = vmatprep.subr.mxu0 0.0
    %1973 = vmatpush1.xpose.msra.mxu0 0.0
    %1974 = vmatprep.subr.mxu0 0.0
    %1975 = vmatpush1.xpose.msra.mxu0 0.0
    %1976 = vmatprep.subr.mxu0 0.0
    %1977 = vmatpush1.xpose.msra.mxu0 0.0
    %1978 = vmatprep.subr.mxu0 0.0
    %1979 = vmatpush1.xpose.msra.mxu0 0.0
    %1980 = vmatprep.subr.mxu0 0.0
    %1981 = vmatpush1.xpose.msra.mxu0 0.0
    %1982 = vmatprep.subr.mxu0 0.0
    %1983 = vmatpush1.xpose.msra.mxu0 0.0
    %1984 = vmatprep.subr.mxu0 0.0
    %1985 = vmatpush1.xpose.msra.mxu0 0.0
    %1986 = vmatprep.subr.mxu0 0.0
    %1987 = vmatpush1.xpose.msra.mxu0 0.0
    %1988 = vmatprep.subr.mxu0 0.0
    %1989 = vmatpush1.xpose.msra.mxu0 0.0
    %1990 = vmatprep.subr.mxu0 0.0
    %1991 = vmatpush1.xpose.msra.mxu0 0.0
    %1992 = vmatprep.subr.mxu0 0.0
    %1993 = vmatpush1.xpose.msra.mxu0 0.0
    %1994 = vmatprep.subr.mxu0 0.0
    %1995 = vmatpush1.xpose.msra.mxu0 0.0
    %1996 = vmatprep.mubr.f32.mxu0 %v1834
    %1997 = vmatmul.mubr.f32.gmra.mrb[0].mxu0 %v1833
    %v1998 = vpop.f32.mrb[0].mxu0
    %v1999 = vadd.f32 %v1914, %v1998
    %v2000 = vpop.f32.mrb[0].mxu0
    %2001 = vmatprep.mubr.f32.mxu0 %v1838
    %2002 = vmatmul.mubr.f32.gmra.mrb[0].mxu0 %v1837
    %v2003 = vpop.f32.mrb[0].mxu0
    %v2004 = vadd.f32 %v1919, %v2003
    %v2005 = vpop.f32.mrb[0].mxu0
    %2006 = vmatprep.mubr.f32.mxu0 %v1842
    %2007 = vmatmul.mubr.f32.gmra.mrb[0].mxu0 %v1841
    %v2008 = vpop.f32.mrb[0].mxu0
    %v2009 = vadd.f32 %v1924, %v2008
    %v2010 = vpop.f32.mrb[0].mxu0
    %2011 = vmatprep.mubr.f32.mxu0 %v1846
    %2012 = vmatmul.mubr.f32.gmra.mrb[0].mxu0 %v1845
    %v2013 = vpop.f32.mrb[0].mxu0
    %v2014 = vadd.f32 %v1929, %v2013
    %v2015 = vpop.f32.mrb[0].mxu0
    %2016 = vdwg.mxu0
    %v2017 = vld [vmem:[%s11] sm:$0xff]
    %v2018 = vld [vmem:[%s11 + $0x8] sm:$0xff]
    %v2019 = vld [vmem:[%s11 + $0x10] sm:$0xff]
    %v2020 = vld [vmem:[%s11 + $0x18] sm:$0x1]
    %v2021 = vadd.f32 %v2017, %v1999
    %v2022 = vadd.f32 %v2018, %v2004
    %v2023 = vadd.f32 %v2019, %v2009
    %v2024 = vadd.f32 %v2020, %v2014
    %vm2025 = vcmask 326656
    %2026 = vst.msk [vmem:[%s11] sm:$0xff] %vm2025, %v2021
    %2027 = vst.msk [vmem:[%s11 + $0x8] sm:$0xff] %vm2025, %v2022
    %2028 = vst.msk [vmem:[%s11 + $0x10] sm:$0xff] %vm2025, %v2023
    %vm2029 = vcmask 319488
    %2030 = vst.msk [vmem:[%s11 + $0x18] sm:$0x1] %vm2029, %v2024
    %v2031 = vld [vmem:[#allocation6] sm:$0x1]
    %v2032 = vadd.f32 %v961, %v962
    %v2033 = vadd.f32 %v2032, %v963
    %v2034 = vadd.f32 %v2033, %v964
    %v2035 = vadd.f32 %v2031, %v2034
    %2036 = vst [vmem:[#allocation6] sm:$0x1] %v2035
    %v2037 = vld [vmem:[#allocation7] sm:$0x1]
    %v2038 = vadd.f32 %v244, %v251
    %v2039 = vadd.f32 %v2038, %v258
    %v2040 = vadd.f32 %v2039, %v265
    %v2041 = vadd.f32 %v2037, %v2040
    %2042 = vst [vmem:[#allocation7] sm:$0x1] %v2041
    // Predicated region
    $region34: #{tpu_custom_call.1} parent=1 // pred_check
      _
    $region35: #{tpu_custom_call.1} parent=1 // pred_check_branch
      %2044 = sbr.rel (0) target = $region37
    $region36: #{tpu_custom_call.1} parent=1 // pred_region
      %s2045 = sadd.s32 0, 0
      %s2046 = smul.u32 4, %s2045
      %s2048 = ssub.s32 256, 256
      %2049 = vsyncadd [#allocation3], %s2048
      %s2050 = smul.addr %s2046, 64
      %s2051 = scalar_lea.hbm %s7, %s2050
      %s2053 = sshll.u32 [#allocation2], 4
      %s2054 = int_to_ptr.vmem [resolvable:$true] %s2053
      %2056 = dma.vmem_to_hbm [thread:$0]  %s2054, 256, %s2051, [#allocation3]
    $region37: #{tpu_custom_call.1} parent=1 // pred_fallthru
      _
    // Predicated region
    $region38: #{tpu_custom_call.1} parent=1 // pred_check
      _
    $region39: #{tpu_custom_call.1} parent=1 // pred_check_branch
      %2058 = sbr.rel (0) target = $region41
    $region40: #{tpu_custom_call.1} parent=1 // pred_region
      %s2059 = sadd.s32 0, 0
      %s2060 = smul.u32 4, %s2059
      %s2062 = ssub.s32 64, 64
      %2063 = vsyncadd [#allocation5], %s2062
      %s2064 = smul.addr %s2060, 16
      %s2065 = scalar_lea.hbm %s8, %s2064
      %s2067 = sshll.u32 [#allocation4], 4
      %s2068 = int_to_ptr.vmem [resolvable:$true] %s2067
      %2070 = dma.vmem_to_hbm [thread:$0]  %s2068, 64, %s2065, [#allocation5]
    $region41: #{tpu_custom_call.1} parent=1 // pred_fallthru
      _
    // Predicated region
    $region42: #{tpu_custom_call.1} parent=1 // pred_check
      _
    $region43: #{tpu_custom_call.1} parent=1 // pred_check_branch
      %2072 = sbr.rel (0) target = $region45
    $region44: #{tpu_custom_call.1} parent=1 // pred_region
      %s2074 = ssub.s32 16, 16
      %2075 = vsyncadd [#allocation5], %s2074
      %s2077 = sshll.u32 [#allocation6], 4
      %s2078 = int_to_ptr.vmem [resolvable:$true] %s2077
      %2080 = dma.vmem_to_hbm [thread:$0]  %s2078, 16, %s9, [#allocation5]
    $region45: #{tpu_custom_call.1} parent=1 // pred_fallthru
      _
    // Predicated region
    $region46: #{tpu_custom_call.1} parent=1 // pred_check
      _
    $region47: #{tpu_custom_call.1} parent=1 // pred_check_branch
      %2082 = sbr.rel (0) target = $region49
    $region48: #{tpu_custom_call.1} parent=1 // pred_region
      %s2084 = ssub.s32 16, 16
      %2085 = vsyncadd [#allocation8], %s2084
      %s2087 = sshll.u32 [#allocation7], 4
      %s2088 = int_to_ptr.vmem [resolvable:$true] %s2087
      %2090 = dma.vmem_to_hbm [thread:$0]  %s2088, 16, %s10, [#allocation8]
    $region49: #{tpu_custom_call.1} parent=1 // pred_fallthru
      _
    // Predicated region
    $region50: #{tpu_custom_call.1} parent=1 // pred_check
      _
    $region51: #{tpu_custom_call.1} parent=1 // pred_check_branch
      %2092 = sbr.rel (0) target = $region53
    $region52: #{tpu_custom_call.1} parent=1 // pred_region
      _
    $region53: #{tpu_custom_call.1} parent=1 // pred_fallthru
      _
    // Predicated region
    $region54: #{tpu_custom_call.1} parent=1 // pred_check
      _
    $region55: #{tpu_custom_call.1} parent=1 // pred_check_branch
      %2094 = sbr.rel (0) target = $region57
    $region56: #{tpu_custom_call.1} parent=1 // pred_region
      %2095 = dma.done [#allocation3], 256
    $region57: #{tpu_custom_call.1} parent=1 // pred_fallthru
      _
    // Predicated region
    $region58: #{tpu_custom_call.1} parent=1 // pred_check
      _
    $region59: #{tpu_custom_call.1} parent=1 // pred_check_branch
      %2097 = sbr.rel (0) target = $region61
    $region60: #{tpu_custom_call.1} parent=1 // pred_region
      %2098 = dma.done [#allocation5], 64
    $region61: #{tpu_custom_call.1} parent=1 // pred_fallthru
      _
    // Predicated region
    $region62: #{tpu_custom_call.1} parent=1 // pred_check
      _
    $region63: #{tpu_custom_call.1} parent=1 // pred_check_branch
      %2100 = sbr.rel (0) target = $region65
    $region64: #{tpu_custom_call.1} parent=1 // pred_region
      %2101 = dma.done [#allocation5], 16
    $region65: #{tpu_custom_call.1} parent=1 // pred_fallthru
      _
    // Predicated region
    $region66: #{tpu_custom_call.1} parent=1 // pred_check
      _
    $region67: #{tpu_custom_call.1} parent=1 // pred_check_branch
      %2103 = sbr.rel (0) target = $region69
    $region68: #{tpu_custom_call.1} parent=1 // pred_region
      %2104 = dma.done [#allocation8], 16
    $region69: #{tpu_custom_call.1} parent=1 // pred_fallthru
      _
    // Predicated region
    $region70: #{tpu_custom_call.1} parent=1 // pred_check
      _
    $region71: #{tpu_custom_call.1} parent=1 // pred_check_branch
      %2106 = sbr.rel (0) target = $region73
    $region72: #{tpu_custom_call.1} parent=1 // pred_region
      _
    $region73: #{tpu_custom_call.1} parent=1 // pred_fallthru
      _
    %2107 = vsyncpa [#allocation3], 1
    %2108 = vsyncpa [#allocation5], 1
    %2109 = vsyncpa [#allocation8], 1

</llo_original>
